<compile_context>
chip_gen: v7x
topology: tpu7x:2x2x1
jax: 0.10.0
libtpu: 0.0.40
codegen_flags: <defaults>
</compile_context>

<pallas_src>
import functools
from typing import NamedTuple

import jax
import jax.numpy as jnp
from jax.experimental import pallas as pl
from jax.experimental.pallas import tpu as pltpu

EPS = 1e-5  # nn.LayerNorm default


def _round_up(a, m):
    return (a + m - 1) // m * m


def _cdiv(a, b):
    return (a + b - 1) // b


def _vmem_budget(frac=0.8):
    """~80% of physical VMEM (leaves headroom for compiler scratch/spills)."""
    try:
        cap = pltpu.get_tpu_info().vmem_capacity_bytes
    except Exception:
        cap = 64 * 1024 * 1024  # conservative fallback (v7x per-core size)
    return int(cap * frac)


def _choose_tm(B, tm_max=256, min_tiles=4):
    """Rows per batch tile: multiple of 8, prefer >= min_tiles grid steps."""
    bp8 = _round_up(B, 8)
    tm = min(tm_max, bp8)
    # Halve (keeping a multiple of 8) until we have enough steps to pipeline /
    # balance both TensorCores, but never below 64 rows per step.
    while tm > 64 and tm % 16 == 0 and _cdiv(bp8, tm) < min_tiles:
        tm //= 2
    return tm


def _choose_tk(d3p, cap=512):
    """Lane chunk of the 3*dim intermediate; multiple of 128 dividing d3p."""
    if d3p <= cap:
        return d3p
    for cand in (512, 384, 256, 128):
        if cand <= cap and d3p % cand == 0:
            return cand
    return 128  # unreachable: d3p is always a multiple of 384


class BlockParams(NamedTuple):
    dim: int
    dp: int
    d3p: int
    gamma: jax.Array   # (1, Dp)   f32
    beta: jax.Array    # (1, Dp)   f32
    wf1: jax.Array     # (Dp, D3p) bf16   first half of f weight
    bf1: jax.Array     # (1, D3p)  f32    first half of f bias
    wg: jax.Array      # (D3p, Dp) bf16   g weight
    w2g: jax.Array     # (Dp, Dp)  bf16   folded wf2 @ wg
    bg: jax.Array      # (1, Dp)   f32    folded bg + bf2 @ wg


def prepare_block_params(gamma, beta, wf, bf, wg, bg):
    """Pad/cast parameters once; reuse across block_forward calls."""
    D = gamma.shape[0]
    D3 = 3 * D
    Dp = _round_up(D, 128)
    D3p = 3 * Dp
    f32, bf16 = jnp.float32, jnp.bfloat16

    gamma = gamma.astype(f32)
    beta = beta.astype(f32)
    wf = wf.astype(f32)
    bf = bf.astype(f32)
    wg = wg.astype(f32)
    bg = bg.astype(f32)

    wf1, wf2 = wf[:, :D3], wf[:, D3:]
    bf1, bf2 = bf[:D3], bf[D3:]

    # Fold the linear x2 path through g (exact in real arithmetic):
    #   (xn @ wf2 + bf2) @ wg + bg == xn @ (wf2 @ wg) + (bf2 @ wg + bg)
    w2g = wf2 @ wg            # (D, D)
    bg_eff = bg + bf2 @ wg    # (D,)

    gp = jnp.zeros((1, Dp), f32).at[0, :D].set(gamma)
    bp = jnp.zeros((1, Dp), f32).at[0, :D].set(beta)
    wf1p = jnp.zeros((Dp, D3p), bf16).at[:D, :D3].set(wf1.astype(bf16))
    bf1p = jnp.zeros((1, D3p), f32).at[0, :D3].set(bf1)
    wgp = jnp.zeros((D3p, Dp), bf16).at[:D3, :D].set(wg.astype(bf16))
    w2gp = jnp.zeros((Dp, Dp), bf16).at[:D, :D].set(w2g.astype(bf16))
    bgp = jnp.zeros((1, Dp), f32).at[0, :D].set(bg_eff)

    return BlockParams(dim=D, dp=Dp, d3p=D3p, gamma=gp, beta=bp,
                       wf1=wf1p, bf1=bf1p, wg=wgp, w2g=w2gp, bg=bgp)


def _block_kernel(x_ref, gamma_ref, beta_ref, wf1_ref, bf1_ref, wg_ref,
                  w2g_ref, bg_ref, o_ref, xn_ref, acc_ref, *, inv_d, d_true, dp):
    k = pl.program_id(1)

    @pl.when(k == 0)
    def _():
        x = x_ref[...].astype(jnp.float32)
        # Two-pass LayerNorm stats over the true feature count D.
        mean = jnp.sum(x, axis=-1, keepdims=True) * inv_d
        centered = x - mean
        if d_true < dp:
            # Zero the padded lanes so they don't pollute variance / outputs.
            lane = jax.lax.broadcasted_iota(jnp.int32, (1, dp), 1)
            centered = jnp.where(lane < d_true, centered, 0.0)
        var = jnp.sum(centered * centered, axis=-1, keepdims=True) * inv_d
        xn = centered * jax.lax.rsqrt(var + EPS)
        xn = xn * gamma_ref[...] + beta_ref[...]   # padded lanes stay 0
        xn_bf = xn.astype(jnp.bfloat16)
        xn_ref[...] = xn_bf
        # Folded linear x2 path + folded biases seed the accumulator.
        acc_ref[...] = (jnp.dot(xn_bf, w2g_ref[...],
                                preferred_element_type=jnp.float32)
                        + bg_ref[...])

    # ReLU path for this 3*dim chunk: relu(xn @ wf1 + bf1) @ wg, accumulated.
    x1 = (jnp.dot(xn_ref[...], wf1_ref[...],
                  preferred_element_type=jnp.float32) + bf1_ref[...])
    m = jnp.maximum(x1, 0.0).astype(jnp.bfloat16)
    acc_ref[...] += jnp.dot(m, wg_ref[...], preferred_element_type=jnp.float32)

    @pl.when(k == pl.num_programs(1) - 1)
    def _():
        o_ref[...] = (x_ref[...].astype(jnp.float32)
                      + acc_ref[...]).astype(o_ref.dtype)


def block_forward(x, params: BlockParams, *, tm=None, tk_cap=512):
    """x: (B, dim). params: from prepare_block_params (cached across calls)."""
    B, D = x.shape
    assert D == params.dim, "x feature dim does not match prepared params"
    Dp, D3p = params.dp, params.d3p

    TM = _choose_tm(B) if tm is None else min(_round_up(tm, 8), _round_up(B, 8))
    TK = _choose_tk(D3p, tk_cap)
    Bp = _round_up(B, TM)

    needs_pad = (Bp != B) or (Dp != D)
    xp = x if not needs_pad else jnp.zeros((Bp, Dp), x.dtype).at[:B, :D].set(x)

    grid = (Bp // TM, D3p // TK)
    kernel = functools.partial(_block_kernel, inv_d=1.0 / D, d_true=D, dp=Dp)

    itemsize = jnp.dtype(x.dtype).itemsize
    bytes_accessed = (2 * Bp * Dp * itemsize                         # x + out
                      + 2 * (params.wf1.size + params.wg.size + params.w2g.size)
                      + 4 * (params.gamma.size + params.beta.size
                             + params.bf1.size + params.bg.size))
    cost = pl.CostEstimate(flops=int(14 * Bp * Dp * Dp),
                           transcendentals=int(Bp),
                           bytes_accessed=int(bytes_accessed))

    out_p = pl.pallas_call(
        kernel,
        out_shape=jax.ShapeDtypeStruct((Bp, Dp), x.dtype),
        grid_spec=pltpu.PrefetchScalarGridSpec(
            num_scalar_prefetch=0,
            grid=grid,
            in_specs=[
                pl.BlockSpec((TM, Dp), lambda i, k: (i, 0)),    # x tile
                pl.BlockSpec((1, Dp), lambda i, k: (0, 0)),     # gamma
                pl.BlockSpec((1, Dp), lambda i, k: (0, 0)),     # beta
                pl.BlockSpec((Dp, TK), lambda i, k: (0, k)),    # wf1 chunk
                pl.BlockSpec((1, TK), lambda i, k: (0, k)),     # bf1 chunk
                pl.BlockSpec((TK, Dp), lambda i, k: (k, 0)),    # wg chunk
                pl.BlockSpec((Dp, Dp), lambda i, k: (0, 0)),    # w2g (folded)
                pl.BlockSpec((1, Dp), lambda i, k: (0, 0)),     # bg_eff
            ],
            out_specs=pl.BlockSpec((TM, Dp), lambda i, k: (i, 0)),
            scratch_shapes=[
                pltpu.VMEM((TM, Dp), jnp.bfloat16),   # normalized activations
                pltpu.VMEM((TM, Dp), jnp.float32),    # g-matmul accumulator
            ],
        ),
        compiler_params=pltpu.CompilerParams(
            dimension_semantics=("parallel", "arbitrary"),
            vmem_limit_bytes=_vmem_budget(),
        ),
        cost_estimate=cost,
    )(xp, params.gamma, params.beta, params.wf1, params.bf1,
      params.wg, params.w2g, params.bg)

    return out_p if not needs_pad else out_p[:B, :D]


def block_reference(x, gamma, beta, wf, bf, wg, bg):
    """Pure-JAX reference matching the PyTorch forward exactly (f32)."""
    x32 = x.astype(jnp.float32)
    mean = jnp.mean(x32, axis=-1, keepdims=True)
    var = jnp.mean((x32 - mean) ** 2, axis=-1, keepdims=True)
    h = (x32 - mean) / jnp.sqrt(var + EPS) * gamma + beta
    h = h @ wf + bf
    B, C = h.shape
    x1, x2 = jnp.split(h.reshape(B, 2, C // 2), 2, axis=1)
    x1, x2 = x1[:, 0], x2[:, 0]
    m = jnp.maximum(x1, 0.0) + x2
    y = m @ wg + bg
    return (x32 + y).astype(x.dtype)


def _make_params(key, D):
    kwf, kbf, kwg, kbg, kg, kb = jax.random.split(key, 6)
    gamma = 1.0 + 0.1 * jax.random.normal(kg, (D,), jnp.float32)
    beta = 0.1 * jax.random.normal(kb, (D,), jnp.float32)
    wf = jax.random.normal(kwf, (D, 6 * D), jnp.float32) * 0.05
    bf = jax.random.normal(kbf, (6 * D,), jnp.float32) * 0.05
    wg = jax.random.normal(kwg, (3 * D, D), jnp.float32) * 0.05
    bg = jax.random.normal(kbg, (D,), jnp.float32) * 0.05
    return gamma, beta, wf, bf, wg, bg


if __name__ == "__main__":
    key = jax.random.PRNGKey(0)
    k1, k2, kp1, kp2 = jax.random.split(key, 4)

    # Case 1: lane-aligned dim, several batch tiles (exercises the 2-D grid).
    B1, D1 = 256, 128
    x1 = jax.random.normal(k1, (B1, D1), jnp.float32)
    raw1 = _make_params(kp1, D1)
    p1 = prepare_block_params(*raw1)          # padded/cast once, reused per call
    out1 = jax.block_until_ready(block_forward(x1, p1))
    ref1 = block_reference(x1, *raw1)
    assert out1.shape == (B1, D1)
    assert jnp.allclose(out1, ref1, atol=5e-2, rtol=5e-2), "mismatch vs reference (D=128)"

    # Case 2: small, non-128-aligned shapes exercising the padding path.
    B2, D2 = 8, 32
    x2 = jax.random.normal(k2, (B2, D2), jnp.float32)
    raw2 = _make_params(kp2, D2)
    p2 = prepare_block_params(*raw2)
    out2 = jax.block_until_ready(block_forward(x2, p2))
    ref2 = block_reference(x2, *raw2)
    assert out2.shape == (B2, D2)
    assert jnp.allclose(out2, ref2, atol=5e-2, rtol=5e-2), "mismatch vs reference (D=32)"

    print("KERNEL_OK")
</pallas_src>

<mosaic_0001>
module attributes {stable_mosaic.version = 11 : i64} {
  func.func @_block_kernel(%arg0: i32, %arg1: i32, %arg2: memref<64x128xf32, #tpu.memory_space<vmem>>, %arg3: memref<1x128xf32, #tpu.memory_space<vmem>>, %arg4: memref<1x128xf32, #tpu.memory_space<vmem>>, %arg5: memref<128x384xbf16, #tpu.memory_space<vmem>>, %arg6: memref<1x384xf32, #tpu.memory_space<vmem>>, %arg7: memref<384x128xbf16, #tpu.memory_space<vmem>>, %arg8: memref<128x128xbf16, #tpu.memory_space<vmem>>, %arg9: memref<1x128xf32, #tpu.memory_space<vmem>>, %arg10: memref<64x128xf32, #tpu.memory_space<vmem>>, %arg11: memref<64x128xbf16, #tpu.memory_space<vmem>>, %arg12: memref<64x128xf32, #tpu.memory_space<vmem>>) attributes {dimension_semantics = [#tpu.dimension_semantics<parallel>, #tpu.dimension_semantics<arbitrary>], iteration_bounds = array<i64: 4, 1>, scalar_prefetch = 0 : i64, scratch_operands = 2 : i64, tpu.core_type = #tpu.core_type<tc>, window_params = [{transform_indices = @transform_0, window_bounds = array<i64: 64, 128>}, {pipeline_mode = #tpu.pipeline_mode<synchronous>, transform_indices = @transform_1, window_bounds = array<i64: 1, 128>}, {pipeline_mode = #tpu.pipeline_mode<synchronous>, transform_indices = @transform_2, window_bounds = array<i64: 1, 128>}, {transform_indices = @transform_3, window_bounds = array<i64: 128, 384>}, {transform_indices = @transform_4, window_bounds = array<i64: 1, 384>}, {transform_indices = @transform_5, window_bounds = array<i64: 384, 128>}, {pipeline_mode = #tpu.pipeline_mode<synchronous>, transform_indices = @transform_6, window_bounds = array<i64: 128, 128>}, {pipeline_mode = #tpu.pipeline_mode<synchronous>, transform_indices = @transform_7, window_bounds = array<i64: 1, 128>}, {transform_indices = @transform_8, window_bounds = array<i64: 64, 128>}]} {
    %c0_i32 = arith.constant 0 : i32
    %0 = arith.cmpi eq, %arg1, %c0_i32 : i32
    %1 = arith.extui %0 : i1 to i32
    %c0_i32_0 = arith.constant 0 : i32
    %2 = arith.cmpi ne, %1, %c0_i32_0 : i32
    scf.if %2 {
      %c0_16 = arith.constant 0 : index
      %c0_17 = arith.constant 0 : index
      %20 = vector.load %arg2[%c0_16, %c0_17] : memref<64x128xf32, #tpu.memory_space<vmem>>, vector<64x128xf32>
      %cst_18 = arith.constant dense<0.000000e+00> : vector<64xf32>
      %21 = vector.multi_reduction <add>, %20, %cst_18 [1] : vector<64x128xf32> to vector<64xf32>
      %22 = vector.shape_cast %21 : vector<64xf32> to vector<64x1xf32>
      %cst_19 = arith.constant 7.812500e-03 : f32
      %23 = vector.broadcast %cst_19 : f32 to vector<64x1xf32>
      %24 = arith.mulf %22, %23 : vector<64x1xf32>
      %25 = vector.broadcast %24 : vector<64x1xf32> to vector<64x128xf32>
      %26 = arith.subf %20, %25 : vector<64x128xf32>
      %27 = arith.mulf %26, %26 : vector<64x128xf32>
      %cst_20 = arith.constant dense<0.000000e+00> : vector<64xf32>
      %28 = vector.multi_reduction <add>, %27, %cst_20 [1] : vector<64x128xf32> to vector<64xf32>
      %29 = vector.shape_cast %28 : vector<64xf32> to vector<64x1xf32>
      %cst_21 = arith.constant 7.812500e-03 : f32
      %30 = vector.broadcast %cst_21 : f32 to vector<64x1xf32>
      %31 = arith.mulf %29, %30 : vector<64x1xf32>
      %cst_22 = arith.constant 9.99999974E-6 : f32
      %32 = vector.broadcast %cst_22 : f32 to vector<64x1xf32>
      %33 = arith.addf %31, %32 : vector<64x1xf32>
      %34 = math.rsqrt %33 : vector<64x1xf32>
      %35 = vector.broadcast %34 : vector<64x1xf32> to vector<64x128xf32>
      %36 = arith.mulf %26, %35 : vector<64x128xf32>
      %c0_23 = arith.constant 0 : index
      %c0_24 = arith.constant 0 : index
      %37 = vector.load %arg3[%c0_23, %c0_24] : memref<1x128xf32, #tpu.memory_space<vmem>>, vector<1x128xf32>
      %38 = vector.broadcast %37 : vector<1x128xf32> to vector<64x128xf32>
      %39 = arith.mulf %36, %38 : vector<64x128xf32>
      %c0_25 = arith.constant 0 : index
      %c0_26 = arith.constant 0 : index
      %40 = vector.load %arg4[%c0_25, %c0_26] : memref<1x128xf32, #tpu.memory_space<vmem>>, vector<1x128xf32>
      %41 = vector.broadcast %40 : vector<1x128xf32> to vector<64x128xf32>
      %42 = arith.addf %39, %41 : vector<64x128xf32>
      %43 = arith.truncf %42 : vector<64x128xf32> to vector<64x128xbf16>
      %c0_27 = arith.constant 0 : index
      %c0_28 = arith.constant 0 : index
      %44 = vector.load %arg11[%c0_27, %c0_28] : memref<64x128xbf16, #tpu.memory_space<vmem>>, vector<64x128xbf16>
      tpu.vector_store %arg11[%c0_27, %c0_28], %43 {strides = array<i32>} : memref<64x128xbf16, #tpu.memory_space<vmem>>, vector<64x128xbf16>,
      %c0_29 = arith.constant 0 : index
      %c0_30 = arith.constant 0 : index
      %45 = vector.load %arg8[%c0_29, %c0_30] : memref<128x128xbf16, #tpu.memory_space<vmem>>, vector<128x128xbf16>
      %cst_31 = arith.constant dense<0.000000e+00> : vector<64x128xf32>
      %46 = tpu.matmul %43, %45, %cst_31 {dimension_numbers = #tpu.dot_dimension_numbers<[1], [0], [0], [1], [0, 0, 1, 1], [], []>} : vector<64x128xbf16>, vector<128x128xbf16>, vector<64x128xf32> -> vector<64x128xf32>
      %c0_32 = arith.constant 0 : index
      %c0_33 = arith.constant 0 : index
      %47 = vector.load %arg9[%c0_32, %c0_33] : memref<1x128xf32, #tpu.memory_space<vmem>>, vector<1x128xf32>
      %48 = vector.broadcast %47 : vector<1x128xf32> to vector<64x128xf32>
      %49 = arith.addf %46, %48 : vector<64x128xf32>
      %c0_34 = arith.constant 0 : index
      %c0_35 = arith.constant 0 : index
      %50 = vector.load %arg12[%c0_34, %c0_35] : memref<64x128xf32, #tpu.memory_space<vmem>>, vector<64x128xf32>
      tpu.vector_store %arg12[%c0_34, %c0_35], %49 {strides = array<i32>} : memref<64x128xf32, #tpu.memory_space<vmem>>, vector<64x128xf32>,
    } else {
    }
    %c0 = arith.constant 0 : index
    %c0_1 = arith.constant 0 : index
    %3 = vector.load %arg11[%c0, %c0_1] : memref<64x128xbf16, #tpu.memory_space<vmem>>, vector<64x128xbf16>
    %c0_2 = arith.constant 0 : index
    %c0_3 = arith.constant 0 : index
    %4 = vector.load %arg5[%c0_2, %c0_3] : memref<128x384xbf16, #tpu.memory_space<vmem>>, vector<128x384xbf16>
    %cst = arith.constant dense<0.000000e+00> : vector<64x384xf32>
    %5 = tpu.matmul %3, %4, %cst {dimension_numbers = #tpu.dot_dimension_numbers<[1], [0], [0], [1], [0, 0, 1, 1], [], []>} : vector<64x128xbf16>, vector<128x384xbf16>, vector<64x384xf32> -> vector<64x384xf32>
    %c0_4 = arith.constant 0 : index
    %c0_5 = arith.constant 0 : index
    %6 = vector.load %arg6[%c0_4, %c0_5] : memref<1x384xf32, #tpu.memory_space<vmem>>, vector<1x384xf32>
    %7 = vector.broadcast %6 : vector<1x384xf32> to vector<64x384xf32>
    %8 = arith.addf %5, %7 : vector<64x384xf32>
    %cst_6 = arith.constant 0.000000e+00 : f32
    %9 = vector.broadcast %cst_6 : f32 to vector<64x384xf32>
    %10 = arith.maximumf %8, %9 : vector<64x384xf32>
    %11 = arith.truncf %10 : vector<64x384xf32> to vector<64x384xbf16>
    %c0_7 = arith.constant 0 : index
    %c0_8 = arith.constant 0 : index
    %12 = vector.load %arg12[%c0_7, %c0_8] : memref<64x128xf32, #tpu.memory_space<vmem>>, vector<64x128xf32>
    %c0_9 = arith.constant 0 : index
    %c0_10 = arith.constant 0 : index
    %13 = vector.load %arg7[%c0_9, %c0_10] : memref<384x128xbf16, #tpu.memory_space<vmem>>, vector<384x128xbf16>
    %cst_11 = arith.constant dense<0.000000e+00> : vector<64x128xf32>
    %14 = tpu.matmul %11, %13, %cst_11 {dimension_numbers = #tpu.dot_dimension_numbers<[1], [0], [0], [1], [0, 0, 1, 1], [], []>} : vector<64x384xbf16>, vector<384x128xbf16>, vector<64x128xf32> -> vector<64x128xf32>
    %15 = arith.addf %12, %14 : vector<64x128xf32>
    %c0_12 = arith.constant 0 : index
    %c0_13 = arith.constant 0 : index
    %16 = vector.load %arg12[%c0_12, %c0_13] : memref<64x128xf32, #tpu.memory_space<vmem>>, vector<64x128xf32>
    tpu.vector_store %arg12[%c0_12, %c0_13], %15 {strides = array<i32>} : memref<64x128xf32, #tpu.memory_space<vmem>>, vector<64x128xf32>,
    %c0_i32_14 = arith.constant 0 : i32
    %17 = arith.cmpi eq, %arg1, %c0_i32_14 : i32
    %18 = arith.extui %17 : i1 to i32
    %c0_i32_15 = arith.constant 0 : i32
    %19 = arith.cmpi ne, %18, %c0_i32_15 : i32
    scf.if %19 {
      %c0_16 = arith.constant 0 : index
      %c0_17 = arith.constant 0 : index
      %20 = vector.load %arg2[%c0_16, %c0_17] : memref<64x128xf32, #tpu.memory_space<vmem>>, vector<64x128xf32>
      %c0_18 = arith.constant 0 : index
      %c0_19 = arith.constant 0 : index
      %21 = vector.load %arg12[%c0_18, %c0_19] : memref<64x128xf32, #tpu.memory_space<vmem>>, vector<64x128xf32>
      %22 = arith.addf %20, %21 : vector<64x128xf32>
      %c0_20 = arith.constant 0 : index
      %c0_21 = arith.constant 0 : index
      %23 = vector.load %arg10[%c0_20, %c0_21] : memref<64x128xf32, #tpu.memory_space<vmem>>, vector<64x128xf32>
      tpu.vector_store %arg10[%c0_20, %c0_21], %22 {strides = array<i32>} : memref<64x128xf32, #tpu.memory_space<vmem>>, vector<64x128xf32>,
    } else {
    }
    return
  }
  func.func @transform_0(%arg0: i32, %arg1: i32) -> (i32, i32) {
    %c0_i32 = arith.constant 0 : i32
    %c0_i32_0 = arith.constant 0 : i32
    return %arg0, %c0_i32 : i32, i32
  }
  func.func @transform_1(%arg0: i32, %arg1: i32) -> (i32, i32) {
    %c0_i32 = arith.constant 0 : i32
    %c0_i32_0 = arith.constant 0 : i32
    %c0_i32_1 = arith.constant 0 : i32
    return %c0_i32, %c0_i32_0 : i32, i32
  }
  func.func @transform_2(%arg0: i32, %arg1: i32) -> (i32, i32) {
    %c0_i32 = arith.constant 0 : i32
    %c0_i32_0 = arith.constant 0 : i32
    %c0_i32_1 = arith.constant 0 : i32
    return %c0_i32, %c0_i32_0 : i32, i32
  }
  func.func @transform_3(%arg0: i32, %arg1: i32) -> (i32, i32) {
    %c0_i32 = arith.constant 0 : i32
    %c0_i32_0 = arith.constant 0 : i32
    return %c0_i32, %arg1 : i32, i32
  }
  func.func @transform_4(%arg0: i32, %arg1: i32) -> (i32, i32) {
    %c0_i32 = arith.constant 0 : i32
    %c0_i32_0 = arith.constant 0 : i32
    return %c0_i32, %arg1 : i32, i32
  }
  func.func @transform_5(%arg0: i32, %arg1: i32) -> (i32, i32) {
    %c0_i32 = arith.constant 0 : i32
    %c0_i32_0 = arith.constant 0 : i32
    return %arg1, %c0_i32 : i32, i32
  }
  func.func @transform_6(%arg0: i32, %arg1: i32) -> (i32, i32) {
    %c0_i32 = arith.constant 0 : i32
    %c0_i32_0 = arith.constant 0 : i32
    %c0_i32_1 = arith.constant 0 : i32
    return %c0_i32, %c0_i32_0 : i32, i32
  }
  func.func @transform_7(%arg0: i32, %arg1: i32) -> (i32, i32) {
    %c0_i32 = arith.constant 0 : i32
    %c0_i32_0 = arith.constant 0 : i32
    %c0_i32_1 = arith.constant 0 : i32
    return %c0_i32, %c0_i32_0 : i32, i32
  }
  func.func @transform_8(%arg0: i32, %arg1: i32) -> (i32, i32) {
    %c0_i32 = arith.constant 0 : i32
    %c0_i32_0 = arith.constant 0 : i32
    return %arg0, %c0_i32 : i32, i32
  }
}

</mosaic_0001>

<llo_original>
// kernel: tpu_custom_call.1
$region0: #{tpu_custom_call.1}
  #allocation0 [shape = 'u32[]', space=smem, size = 0x4, offset = 0x4, fixed_abs, tag = 'smem constant byte address 0x4 - core index']
  #allocation1 [shape = 'u32[144,128]{1,0:T(1,128)}', space=vmem, size = 0x12000, scoped, tag = 'internal scratch']
  #allocation2 [shape = 'bf16[64,128]{1,0:T(16,128)(2,1)}', space=vmem, size = 0x4000, scoped, tag = 'scratch operand']
  #allocation3 [shape = 'f32[64,128]{1,0:T(8,128)}', space=vmem, size = 0x8000, scoped, tag = 'scratch operand']
  %s0 = inlined_call_operand.hbm [shape: f32[256,128], index: 0, kind: input, shape index: {}]
  %s1 = inlined_call_operand.vmem [shape: f32[1,128], index: 1, kind: input, shape index: {}]
  %s2 = inlined_call_operand.vmem [shape: f32[1,128], index: 2, kind: input, shape index: {}]
  %s3 = inlined_call_operand.hbm [shape: bf16[128,384], index: 3, kind: input, shape index: {}]
  %s4 = inlined_call_operand.vmem [shape: f32[1,384], index: 4, kind: input, shape index: {}]
  %s5 = inlined_call_operand.hbm [shape: bf16[384,128], index: 5, kind: input, shape index: {}]
  %s6 = inlined_call_operand.hbm [shape: bf16[128,128], index: 6, kind: input, shape index: {}]
  %s7 = inlined_call_operand.vmem [shape: f32[1,128], index: 7, kind: input, shape index: {}]
  %s8 = inlined_call_operand.hbm [shape: f32[256,128], index: 8, kind: output, shape index: {}]
  %s9 = sld [smem:[#allocation0]]
  $region89: #{tpu_custom_call.1} parent=0
    _
  %s11 = ssub.s32 1, %s9
  %s12 = scalar_select 0, %s11, %s9
  $region1: #{tpu_custom_call.1} parent=0
    #allocation4 [shape = 'u8[65536]{0}', space=vmem, size = 0x10000, scoped, tag = 'input window, operand 0']
    #allocation5 [shape = 's32[2]{0}', space=sflag, size = 0x8, scoped, tag = 'scoped memory for tpu_custom_call.1']
    #allocation6 [shape = 's32[2]{0}', space=sflag, size = 0x8, scoped, tag = 'scoped memory for tpu_custom_call.1']
    #allocation7 [shape = 'u8[98304]{0}', space=vmem, size = 0x18000, scoped, tag = 'input window, operand 3, single buffered']
    #allocation8 [shape = 's32[1]{0}', space=sflag, size = 0x4, scoped, tag = 'scoped memory for tpu_custom_call.1']
    #allocation9 [shape = 'u8[98304]{0}', space=vmem, size = 0x18000, scoped, tag = 'input window, operand 5, single buffered']
    #allocation10 [shape = 'u8[32768]{0}', space=vmem, size = 0x8000, scoped, tag = 'input window, operand 6, single buffered']
    #allocation11 [shape = 's32[1]{0}', space=sflag, size = 0x4, scoped, tag = 'scoped memory for tpu_custom_call.1']
    #allocation12 [shape = 'u8[65536]{0}', space=vmem, size = 0x10000, scoped, tag = 'output window, operand 0']
    %13 = vsyncpa [#allocation5], 0
    %s14 = scalar_lea.sflag [#allocation5], 1
    %15 = vsyncpa %s14, 0
    %16 = vsyncpa [#allocation8], 0
    %17 = vsyncpa [#allocation11], 0
    %18 = vsyncpa [#allocation6], 0
    %s19 = scalar_lea.sflag [#allocation6], 1
    %20 = vsyncpa %s19, 0
    loop: start=0, step=1, limit=6
    $region2: #{tpu_custom_call.1} parent=1 // loop_pre_header
      _
    $region3: #{tpu_custom_call.1} parent=1 // loop_header
      %s22 = sphi 0, %s26
      %p23 = scmp.ge.s32.totalorder %s22, 6
      %s29 = sphi 0, %s41
      %s30 = sphi 0, %s37
      %s31 = sphi 0, %s29
      %s32 = sphi 0, %s30
      %s33 = sphi 0, %s31
      %s34 = sphi 0, %s32
      %s44 = sphi 0, %s46
      %s47 = sphi 0, %s44
      %s48 = sphi 0, %s47
      %s64 = sphi 0, %s48
      %s68 = sphi 0, %s68
      %s70 = sphi 0, %s68
      %s71 = sphi 0, %s70
      %s85 = sphi 0, %s71
      %s89 = sphi 0, %s89
      %s91 = sphi 0, %s89
      %s92 = sphi 0, %s91
      %s106 = sphi 0, %s92
      %s112 = sphi 0, %s114
      %s115 = sphi 0, %s112
      %s116 = sphi 0, %s115
      %s132 = sphi 0, %s116
      %s138 = sphi 0, %s140
      %s141 = sphi 0, %s138
      %s142 = sphi 0, %s141
      %s158 = sphi 0, %s142
      %s164 = sphi 0, %s166
      %s167 = sphi 0, %s164
      %s168 = sphi 0, %s167
      %s184 = sphi 0, %s168
      %s188 = sphi 0, %s188
      %s190 = sphi 0, %s188
      %s191 = sphi 0, %s190
      %s205 = sphi 0, %s191
      %s209 = sphi 0, %s209
      %s211 = sphi 0, %s209
      %s212 = sphi 0, %s211
      %s226 = sphi 0, %s212
      %s232 = sphi 0, %s234
      %s235 = sphi 0, %s232
      %s236 = sphi 0, %s235
      %s252 = sphi 0, %s236
    $region4: #{tpu_custom_call.1} parent=1 // loop_header_branch
      %25 = sbr.rel (%p23) target = $region8
    $region5: #{tpu_custom_call.1} parent=1 // loop_body
      %s27 = ssub.s32 %s22, 1
      %s28 = ssub.s32 %s22, 2
      %s35 = sadd.s32 1, %s30
      %p36 = scmp.ge.s32.totalorder %s35, 1
      %s37 = scalar_select %p36, 0, %s35
      %s38 = sadd.s32 1, %s29
      %s39 = scalar_select %p36, %s38, %s29
      %p40 = scmp.ge.s32.totalorder %s39, 4
      %s41 = scalar_select %p40, 0, %s39
      %s42 = ssub.s32 %s29, %s41
      %p43 = scmp.eq.s32.totalorder %s42, 0
      %s45 = sadd.s32 %s44, 1
      %s46 = scalar_select %p43, %s44, %s45
      %p49 = pneg %p43
      %p50 = scmp.eq.s32.totalorder %s22, 3
      %p51 = por %p49, %p50
      %p52 = scmp.ne.s32.totalorder %s44, %s47
      %p53 = scmp.eq.s32.totalorder %s22, 0
      %p54 = por %p52, %p53
      %p55 = scmp.ne.s32.totalorder %s44, %s47
      %p56 = scmp.eq.s32.totalorder %s27, 3
      %p57 = por %p55, %p56
      %p58 = scmp.ne.s32.totalorder %s47, %s48
      %p59 = scmp.eq.s32.totalorder %s27, 0
      %p60 = por %p58, %p59
      %p61 = scmp.ne.s32.totalorder %s47, %s48
      %p62 = scmp.eq.s32.totalorder %s28, 3
      %p63 = por %p61, %p62
      %p65 = scmp.ne.s32.totalorder %s48, %s64
      %p66 = scmp.eq.s32.totalorder %s28, 0
      %p67 = por %p65, %p66
      %s69 = sadd.s32 %s68, 1
      %p72 = scmp.eq.s32.totalorder %s22, 3
      %p73 = scmp.ne.s32.totalorder %s68, %s70
      %p74 = scmp.eq.s32.totalorder %s22, 0
      %p75 = por %p73, %p74
      %p76 = scmp.ne.s32.totalorder %s68, %s70
      %p77 = scmp.eq.s32.totalorder %s27, 3
      %p78 = por %p76, %p77
      %p79 = scmp.ne.s32.totalorder %s70, %s71
      %p80 = scmp.eq.s32.totalorder %s27, 0
      %p81 = por %p79, %p80
      %p82 = scmp.ne.s32.totalorder %s70, %s71
      %p83 = scmp.eq.s32.totalorder %s28, 3
      %p84 = por %p82, %p83
      %p86 = scmp.ne.s32.totalorder %s71, %s85
      %p87 = scmp.eq.s32.totalorder %s28, 0
      %p88 = por %p86, %p87
      %s90 = sadd.s32 %s89, 1
      %p93 = scmp.eq.s32.totalorder %s22, 3
      %p94 = scmp.ne.s32.totalorder %s89, %s91
      %p95 = scmp.eq.s32.totalorder %s22, 0
      %p96 = por %p94, %p95
      %p97 = scmp.ne.s32.totalorder %s89, %s91
      %p98 = scmp.eq.s32.totalorder %s27, 3
      %p99 = por %p97, %p98
      %p100 = scmp.ne.s32.totalorder %s91, %s92
      %p101 = scmp.eq.s32.totalorder %s27, 0
      %p102 = por %p100, %p101
      %p103 = scmp.ne.s32.totalorder %s91, %s92
      %p104 = scmp.eq.s32.totalorder %s28, 3
      %p105 = por %p103, %p104
      %p107 = scmp.ne.s32.totalorder %s92, %s106
      %p108 = scmp.eq.s32.totalorder %s28, 0
      %p109 = por %p107, %p108
      %s110 = ssub.s32 %s30, %s37
      %p111 = scmp.eq.s32.totalorder %s110, 0
      %s113 = sadd.s32 %s112, 1
      %s114 = scalar_select %p111, %s112, %s113
      %p117 = pneg %p111
      %p118 = scmp.eq.s32.totalorder %s22, 3
      %p119 = por %p117, %p118
      %p120 = scmp.ne.s32.totalorder %s112, %s115
      %p121 = scmp.eq.s32.totalorder %s22, 0
      %p122 = por %p120, %p121
      %p123 = scmp.ne.s32.totalorder %s112, %s115
      %p124 = scmp.eq.s32.totalorder %s27, 3
      %p125 = por %p123, %p124
      %p126 = scmp.ne.s32.totalorder %s115, %s116
      %p127 = scmp.eq.s32.totalorder %s27, 0
      %p128 = por %p126, %p127
      %p129 = scmp.ne.s32.totalorder %s115, %s116
      %p130 = scmp.eq.s32.totalorder %s28, 3
      %p131 = por %p129, %p130
      %p133 = scmp.ne.s32.totalorder %s116, %s132
      %p134 = scmp.eq.s32.totalorder %s28, 0
      %p135 = por %p133, %p134
      %s136 = ssub.s32 %s30, %s37
      %p137 = scmp.eq.s32.totalorder %s136, 0
      %s139 = sadd.s32 %s138, 1
      %s140 = scalar_select %p137, %s138, %s139
      %p143 = pneg %p137
      %p144 = scmp.eq.s32.totalorder %s22, 3
      %p145 = por %p143, %p144
      %p146 = scmp.ne.s32.totalorder %s138, %s141
      %p147 = scmp.eq.s32.totalorder %s22, 0
      %p148 = por %p146, %p147
      %p149 = scmp.ne.s32.totalorder %s138, %s141
      %p150 = scmp.eq.s32.totalorder %s27, 3
      %p151 = por %p149, %p150
      %p152 = scmp.ne.s32.totalorder %s141, %s142
      %p153 = scmp.eq.s32.totalorder %s27, 0
      %p154 = por %p152, %p153
      %p155 = scmp.ne.s32.totalorder %s141, %s142
      %p156 = scmp.eq.s32.totalorder %s28, 3
      %p157 = por %p155, %p156
      %p159 = scmp.ne.s32.totalorder %s142, %s158
      %p160 = scmp.eq.s32.totalorder %s28, 0
      %p161 = por %p159, %p160
      %s162 = ssub.s32 %s30, %s37
      %p163 = scmp.eq.s32.totalorder %s162, 0
      %s165 = sadd.s32 %s164, 1
      %s166 = scalar_select %p163, %s164, %s165
      %p169 = pneg %p163
      %p170 = scmp.eq.s32.totalorder %s22, 3
      %p171 = por %p169, %p170
      %p172 = scmp.ne.s32.totalorder %s164, %s167
      %p173 = scmp.eq.s32.totalorder %s22, 0
      %p174 = por %p172, %p173
      %p175 = scmp.ne.s32.totalorder %s164, %s167
      %p176 = scmp.eq.s32.totalorder %s27, 3
      %p177 = por %p175, %p176
      %p178 = scmp.ne.s32.totalorder %s167, %s168
      %p179 = scmp.eq.s32.totalorder %s27, 0
      %p180 = por %p178, %p179
      %p181 = scmp.ne.s32.totalorder %s167, %s168
      %p182 = scmp.eq.s32.totalorder %s28, 3
      %p183 = por %p181, %p182
      %p185 = scmp.ne.s32.totalorder %s168, %s184
      %p186 = scmp.eq.s32.totalorder %s28, 0
      %p187 = por %p185, %p186
      %s189 = sadd.s32 %s188, 1
      %p192 = scmp.eq.s32.totalorder %s22, 3
      %p193 = scmp.ne.s32.totalorder %s188, %s190
      %p194 = scmp.eq.s32.totalorder %s22, 0
      %p195 = por %p193, %p194
      %p196 = scmp.ne.s32.totalorder %s188, %s190
      %p197 = scmp.eq.s32.totalorder %s27, 3
      %p198 = por %p196, %p197
      %p199 = scmp.ne.s32.totalorder %s190, %s191
      %p200 = scmp.eq.s32.totalorder %s27, 0
      %p201 = por %p199, %p200
      %p202 = scmp.ne.s32.totalorder %s190, %s191
      %p203 = scmp.eq.s32.totalorder %s28, 3
      %p204 = por %p202, %p203
      %p206 = scmp.ne.s32.totalorder %s191, %s205
      %p207 = scmp.eq.s32.totalorder %s28, 0
      %p208 = por %p206, %p207
      %s210 = sadd.s32 %s209, 1
      %p213 = scmp.eq.s32.totalorder %s22, 3
      %p214 = scmp.ne.s32.totalorder %s209, %s211
      %p215 = scmp.eq.s32.totalorder %s22, 0
      %p216 = por %p214, %p215
      %p217 = scmp.ne.s32.totalorder %s209, %s211
      %p218 = scmp.eq.s32.totalorder %s27, 3
      %p219 = por %p217, %p218
      %p220 = scmp.ne.s32.totalorder %s211, %s212
      %p221 = scmp.eq.s32.totalorder %s27, 0
      %p222 = por %p220, %p221
      %p223 = scmp.ne.s32.totalorder %s211, %s212
      %p224 = scmp.eq.s32.totalorder %s28, 3
      %p225 = por %p223, %p224
      %p227 = scmp.ne.s32.totalorder %s212, %s226
      %p228 = scmp.eq.s32.totalorder %s28, 0
      %p229 = por %p227, %p228
      %s230 = ssub.s32 %s29, %s41
      %p231 = scmp.eq.s32.totalorder %s230, 0
      %s233 = sadd.s32 %s232, 1
      %s234 = scalar_select %p231, %s232, %s233
      %p237 = pneg %p231
      %p238 = scmp.eq.s32.totalorder %s22, 3
      %p239 = por %p237, %p238
      %p240 = scmp.ne.s32.totalorder %s232, %s235
      %p241 = scmp.eq.s32.totalorder %s22, 0
      %p242 = por %p240, %p241
      %p243 = scmp.ne.s32.totalorder %s232, %s235
      %p244 = scmp.eq.s32.totalorder %s27, 3
      %p245 = por %p243, %p244
      %p246 = scmp.ne.s32.totalorder %s235, %s236
      %p247 = scmp.eq.s32.totalorder %s27, 0
      %p248 = por %p246, %p247
      %p249 = scmp.ne.s32.totalorder %s235, %s236
      %p250 = scmp.eq.s32.totalorder %s28, 3
      %p251 = por %p249, %p250
      %p253 = scmp.ne.s32.totalorder %s236, %s252
      %p254 = scmp.eq.s32.totalorder %s28, 0
      %p255 = por %p253, %p254
      %p256 = scmp.le.s32.totalorder 1, %s22
      %p257 = scmp.lt.s32.totalorder %s22, 5
      %p258 = pnand %p256, %p257
      %p259 = pneg %p258
      // Predicated region
      $region9: #{tpu_custom_call.1} parent=5 // pred_check
        _
      $region10: #{tpu_custom_call.1} parent=5 // pred_check_branch
        %261 = sbr.rel (%p258) target = $region12
      $region11: #{tpu_custom_call.1} parent=5 // pred_region
        %s262 = ssub.s32 %s22, 1
        // Predicated region
        $region13: #{tpu_custom_call.1} parent=11 // pred_check
          %p263 = pneg %p81
        $region14: #{tpu_custom_call.1} parent=11 // pred_check_branch
          %265 = sbr.rel (%p263) target = $region16
        $region15: #{tpu_custom_call.1} parent=11 // pred_region
          _
        $region16: #{tpu_custom_call.1} parent=11 // pred_fallthru
          _
        // Predicated region
        $region17: #{tpu_custom_call.1} parent=11 // pred_check
          %p266 = pneg %p102
        $region18: #{tpu_custom_call.1} parent=11 // pred_check_branch
          %268 = sbr.rel (%p266) target = $region20
        $region19: #{tpu_custom_call.1} parent=11 // pred_region
          _
        $region20: #{tpu_custom_call.1} parent=11 // pred_fallthru
          _
        // Predicated region
        $region21: #{tpu_custom_call.1} parent=11 // pred_check
          %p269 = pneg %p128
        $region22: #{tpu_custom_call.1} parent=11 // pred_check_branch
          %271 = sbr.rel (%p269) target = $region24
        $region23: #{tpu_custom_call.1} parent=11 // pred_region
          %s272 = smul.u32 3, %s32
          %s274 = ssub.s32 3072, 3072
          %275 = vsyncadd [#allocation8], %s274
          %s276 = smul.addr %s272, 64
          %s277 = scalar_lea.hbm %s3, %s276
          %s278 = sshll.u32 [#allocation7], 4
          %s279 = int_to_ptr.vmem [resolvable:$true] %s278
          %284 = dma.hbm_to_vmem [thread:$0]  %s277, 3072, %s279, [#allocation8], 192, 192, 12
        $region24: #{tpu_custom_call.1} parent=11 // pred_fallthru
          _
        // Predicated region
        $region25: #{tpu_custom_call.1} parent=11 // pred_check
          %p285 = pneg %p154
        $region26: #{tpu_custom_call.1} parent=11 // pred_check_branch
          %287 = sbr.rel (%p285) target = $region28
        $region27: #{tpu_custom_call.1} parent=11 // pred_region
          %s288 = smul.u32 3, %s32
          %p289 = scmp.lt.s32.totalorder %s288, 2
          %s290 = scalar_select %p289, %s288, 2
          %s291 = scalar_lea.vmem %s4, %s290
          %s292 = smul.u32 3, %s32
        $region28: #{tpu_custom_call.1} parent=11 // pred_fallthru
          _
        // Predicated region
        $region29: #{tpu_custom_call.1} parent=11 // pred_check
          %p293 = pneg %p180
        $region30: #{tpu_custom_call.1} parent=11 // pred_check_branch
          %295 = sbr.rel (%p293) target = $region32
        $region31: #{tpu_custom_call.1} parent=11 // pred_region
          %s296 = smul.u32 48, %s32
          %s298 = ssub.s32 3072, 3072
          %299 = vsyncadd [#allocation8], %s298
          %s300 = smul.addr %s296, 64
          %s301 = scalar_lea.hbm %s5, %s300
          %s302 = sshll.u32 [#allocation9], 4
          %s303 = int_to_ptr.vmem [resolvable:$true] %s302
          %308 = dma.hbm_to_vmem [thread:$0]  %s301, 3072, %s303, [#allocation8], 64, 64, 4
        $region32: #{tpu_custom_call.1} parent=11 // pred_fallthru
          _
        // Predicated region
        $region33: #{tpu_custom_call.1} parent=11 // pred_check
          %p309 = pneg %p201
        $region34: #{tpu_custom_call.1} parent=11 // pred_check_branch
          %311 = sbr.rel (%p309) target = $region36
        $region35: #{tpu_custom_call.1} parent=11 // pred_region
          %s313 = ssub.s32 1024, 1024
          %314 = vsyncadd [#allocation11], %s313
          %s315 = sshll.u32 [#allocation10], 4
          %s316 = int_to_ptr.vmem [resolvable:$true] %s315
          %321 = dma.hbm_to_vmem [thread:$0]  %s6, 1024, %s316, [#allocation11], 64, 64, 4
        $region36: #{tpu_custom_call.1} parent=11 // pred_fallthru
          _
        // Predicated region
        $region37: #{tpu_custom_call.1} parent=11 // pred_check
          %p322 = pneg %p222
        $region38: #{tpu_custom_call.1} parent=11 // pred_check_branch
          %324 = sbr.rel (%p322) target = $region40
        $region39: #{tpu_custom_call.1} parent=11 // pred_region
          _
        $region40: #{tpu_custom_call.1} parent=11 // pred_fallthru
          _
      $region12: #{tpu_custom_call.1} parent=5 // pred_fallthru
        _
      %p325 = scmp.lt.s32.totalorder %s22, 4
      // Predicated region
      $region41: #{tpu_custom_call.1} parent=5 // pred_check
        %p326 = pneg %p325
      $region42: #{tpu_custom_call.1} parent=5 // pred_check_branch
        %328 = sbr.rel (%p326) target = $region44
      $region43: #{tpu_custom_call.1} parent=5 // pred_region
        // Predicated region
        $region45: #{tpu_custom_call.1} parent=43 // pred_check
          %p329 = pneg %p54
        $region46: #{tpu_custom_call.1} parent=43 // pred_check_branch
          %331 = sbr.rel (%p329) target = $region48
        $region47: #{tpu_custom_call.1} parent=43 // pred_region
          %s332 = sand.u32 %s44, 1
          %s333 = scalar_lea.sflag [#allocation5], %s332
          %s334 = sand.u32 %s44, 1
          %s335 = smul.addr %s334, 64
          %s336 = scalar_lea.vmem [#allocation4], %s335
          %s337 = smul.u32 8, %s29
          %s339 = ssub.s32 1024, 1024
          %340 = vsyncadd %s333, %s339
          %s341 = smul.addr %s337, 128
          %s342 = scalar_lea.hbm %s0, %s341
          %s343 = sshll.u32 %s336, 4
          %s344 = int_to_ptr.vmem [resolvable:$true] %s343
          %349 = dma.hbm_to_vmem [thread:$0]  %s342, 1024, %s344, %s333, 128, 128, 8
        $region48: #{tpu_custom_call.1} parent=43 // pred_fallthru
          _
      $region44: #{tpu_custom_call.1} parent=5 // pred_fallthru
        _
      %p350 = scmp.le.s32.totalorder 1, %s22
      %p351 = scmp.lt.s32.totalorder %s22, 5
      %p352 = pnand %p350, %p351
      %p353 = pneg %p352
      // Predicated region
      $region49: #{tpu_custom_call.1} parent=5 // pred_check
        _
      $region50: #{tpu_custom_call.1} parent=5 // pred_check_branch
        %355 = sbr.rel (%p352) target = $region52
      $region51: #{tpu_custom_call.1} parent=5 // pred_region
        %s356 = ssub.s32 %s22, 1
        %s357 = sand.u32 %s47, 1
        %s358 = scalar_lea.sflag [#allocation5], %s357
        %s359 = sand.u32 %s47, 1
        %s360 = smul.addr %s359, 64
        %s361 = scalar_lea.vmem [#allocation4], %s360
        // Predicated region
        $region53: #{tpu_custom_call.1} parent=51 // pred_check
          %p362 = pneg %p60
        $region54: #{tpu_custom_call.1} parent=51 // pred_check_branch
          %364 = sbr.rel (%p362) target = $region56
        $region55: #{tpu_custom_call.1} parent=51 // pred_region
          %365 = dma.done %s358, 1024
        $region56: #{tpu_custom_call.1} parent=51 // pred_fallthru
          _
        // Predicated region
        $region57: #{tpu_custom_call.1} parent=51 // pred_check
          %p366 = pneg %p128
        $region58: #{tpu_custom_call.1} parent=51 // pred_check_branch
          %368 = sbr.rel (%p366) target = $region60
        $region59: #{tpu_custom_call.1} parent=51 // pred_region
          %369 = dma.done [#allocation8], 3072
        $region60: #{tpu_custom_call.1} parent=51 // pred_fallthru
          _
        // Predicated region
        $region61: #{tpu_custom_call.1} parent=51 // pred_check
          %p370 = pneg %p180
        $region62: #{tpu_custom_call.1} parent=51 // pred_check_branch
          %372 = sbr.rel (%p370) target = $region64
        $region63: #{tpu_custom_call.1} parent=51 // pred_region
          %373 = dma.done [#allocation8], 3072
        $region64: #{tpu_custom_call.1} parent=51 // pred_fallthru
          _
        // Predicated region
        $region65: #{tpu_custom_call.1} parent=51 // pred_check
          %p374 = pneg %p201
        $region66: #{tpu_custom_call.1} parent=51 // pred_check_branch
          %376 = sbr.rel (%p374) target = $region68
        $region67: #{tpu_custom_call.1} parent=51 // pred_region
          %377 = dma.done [#allocation11], 1024
        $region68: #{tpu_custom_call.1} parent=51 // pred_fallthru
          _
        %s378 = sand.u32 %s47, 1
        %s379 = scalar_lea.sflag [#allocation5], %s378
        %s380 = sand.u32 %s47, 1
        %s381 = smul.addr %s380, 64
        %s382 = scalar_lea.vmem [#allocation4], %s381
        %p383 = pneg %p60
        %p384 = pneg %p57
        %p385 = pneg %p81
        %p386 = pneg %p78
        %p387 = pneg %p102
        %p388 = pneg %p99
        %p389 = pneg %p128
        %p390 = pneg %p125
        %s391 = smul.u32 3, %s32
        %p392 = scmp.lt.s32.totalorder %s391, 2
        %s393 = scalar_select %p392, %s391, 2
        %s394 = scalar_lea.vmem %s4, %s393
        %p395 = pneg %p154
        %p396 = pneg %p151
        %p397 = pneg %p180
        %p398 = pneg %p177
        %p399 = pneg %p201
        %p400 = pneg %p198
        %p401 = pneg %p222
        %p402 = pneg %p219
        %p403 = pneg %p248
        %p404 = pneg %p245
        %s405 = sand.u32 %s235, 1
        %s406 = scalar_lea.sflag [#allocation6], %s405
        %s407 = sand.u32 %s235, 1
        %s408 = smul.addr %s407, 64
        %s409 = scalar_lea.vmem [#allocation12], %s408
        %s410 = smul.u32 8, %s31
        %s411 = smul.u32 3, %s32
        %s412 = smul.u32 3, %s32
        %p413 = scmp.lt.s32.totalorder %s412, 2
        %s414 = scalar_select %p413, %s412, 2
        %s415 = scalar_lea.vmem %s4, %s414
        %s416 = smul.u32 3, %s32
        %s417 = smul.u32 48, %s32
        %s418 = smul.u32 8, %s31
        %p420 = scmp.eq.s32.totalorder %s32, 0
        // Predicated region
        $region69: #{tpu_custom_call.1} parent=51 // pred_check
          %p421 = pneg %p420
        $region70: #{tpu_custom_call.1} parent=51 // pred_check_branch
          %423 = sbr.rel (%p421) target = $region72
        $region71: #{tpu_custom_call.1} parent=51 // pred_region
          %v424 = vld [vmem:[%s361] sm:$0xff]
          %v425 = vld [vmem:[%s361 + $0x8] sm:$0xff]
          %v426 = vld [vmem:[%s361 + $0x10] sm:$0xff]
          %v427 = vld [vmem:[%s361 + $0x18] sm:$0xff]
          %v428 = vld [vmem:[%s361 + $0x20] sm:$0xff]
          %v429 = vld [vmem:[%s361 + $0x28] sm:$0xff]
          %v430 = vld [vmem:[%s361 + $0x30] sm:$0xff]
          %v431 = vld [vmem:[%s361 + $0x38] sm:$0xff]
          %432 = vadd.xlane.f32.xlu0 %v424
          %v433 = vpop.xlane.xlu0 %432
          %434 = vadd.xlane.f32.xlu0 %v425
          %v435 = vpop.xlane.xlu0 %434
          %436 = vadd.xlane.f32.xlu0 %v426
          %v437 = vpop.xlane.xlu0 %436
          %438 = vadd.xlane.f32.xlu0 %v427
          %v439 = vpop.xlane.xlu0 %438
          %440 = vadd.xlane.f32.xlu0 %v428
          %v441 = vpop.xlane.xlu0 %440
          %442 = vadd.xlane.f32.xlu0 %v429
          %v443 = vpop.xlane.xlu0 %442
          %444 = vadd.xlane.f32.xlu0 %v430
          %v445 = vpop.xlane.xlu0 %444
          %446 = vadd.xlane.f32.xlu0 %v431
          %v447 = vpop.xlane.xlu0 %446
          %v448 = vmul.f32 %v433, 0.0078125
          %v449 = vmul.f32 %v435, 0.0078125
          %v450 = vmul.f32 %v437, 0.0078125
          %v451 = vmul.f32 %v439, 0.0078125
          %v452 = vmul.f32 %v441, 0.0078125
          %v453 = vmul.f32 %v443, 0.0078125
          %v454 = vmul.f32 %v445, 0.0078125
          %v455 = vmul.f32 %v447, 0.0078125
          %v456 = vsub.f32 %v424, %v448
          %v457 = vsub.f32 %v425, %v449
          %v458 = vsub.f32 %v426, %v450
          %v459 = vsub.f32 %v427, %v451
          %v460 = vsub.f32 %v428, %v452
          %v461 = vsub.f32 %v429, %v453
          %v462 = vsub.f32 %v430, %v454
          %v463 = vsub.f32 %v431, %v455
          %v464 = vmul.f32 %v456, %v456
          %v465 = vmul.f32 %v457, %v457
          %v466 = vmul.f32 %v458, %v458
          %v467 = vmul.f32 %v459, %v459
          %v468 = vmul.f32 %v460, %v460
          %v469 = vmul.f32 %v461, %v461
          %v470 = vmul.f32 %v462, %v462
          %v471 = vmul.f32 %v463, %v463
          %472 = vadd.xlane.f32.xlu0 %v464
          %v473 = vpop.xlane.xlu0 %472
          %474 = vadd.xlane.f32.xlu0 %v465
          %v475 = vpop.xlane.xlu0 %474
          %476 = vadd.xlane.f32.xlu0 %v466
          %v477 = vpop.xlane.xlu0 %476
          %478 = vadd.xlane.f32.xlu0 %v467
          %v479 = vpop.xlane.xlu0 %478
          %480 = vadd.xlane.f32.xlu0 %v468
          %v481 = vpop.xlane.xlu0 %480
          %482 = vadd.xlane.f32.xlu0 %v469
          %v483 = vpop.xlane.xlu0 %482
          %484 = vadd.xlane.f32.xlu0 %v470
          %v485 = vpop.xlane.xlu0 %484
          %486 = vadd.xlane.f32.xlu0 %v471
          %v487 = vpop.xlane.xlu0 %486
          %v488 = vmul.f32 %v473, 0.0078125
          %v489 = vmul.f32 %v475, 0.0078125
          %v490 = vmul.f32 %v477, 0.0078125
          %v491 = vmul.f32 %v479, 0.0078125
          %v492 = vmul.f32 %v481, 0.0078125
          %v493 = vmul.f32 %v483, 0.0078125
          %v494 = vmul.f32 %v485, 0.0078125
          %v495 = vmul.f32 %v487, 0.0078125
          %v496 = vadd.f32 %v488, 1e-05
          %v497 = vadd.f32 %v489, 1e-05
          %v498 = vadd.f32 %v490, 1e-05
          %v499 = vadd.f32 %v491, 1e-05
          %v500 = vadd.f32 %v492, 1e-05
          %v501 = vadd.f32 %v493, 1e-05
          %v502 = vadd.f32 %v494, 1e-05
          %v503 = vadd.f32 %v495, 1e-05
          %v504 = vrsqrt.pop %v496
          %v505 = vrsqrt.pop %v497
          %v506 = vrsqrt.pop %v498
          %v507 = vrsqrt.pop %v499
          %v508 = vrsqrt.pop %v500
          %v509 = vrsqrt.pop %v501
          %v510 = vrsqrt.pop %v502
          %v511 = vrsqrt.pop %v503
          %v512 = vmul.f32 %v456, %v504
          %v513 = vmul.f32 %v457, %v505
          %v514 = vmul.f32 %v458, %v506
          %v515 = vmul.f32 %v459, %v507
          %v516 = vmul.f32 %v460, %v508
          %v517 = vmul.f32 %v461, %v509
          %v518 = vmul.f32 %v462, %v510
          %v519 = vmul.f32 %v463, %v511
          %v520 = vld [vmem:[%s1] sm:$0x1]
          %v522 = vlaneseq
          %v523 = vshrl.u32 %v522, 7
          %v524 = vsub.s32 0, %v523
          %v525 = vrot.slane %v520, %v524
          %v527 = vmul.f32 %v512, %v525
          %v528 = vmul.f32 %v513, %v525
          %v529 = vmul.f32 %v514, %v525
          %v530 = vmul.f32 %v515, %v525
          %v531 = vmul.f32 %v516, %v525
          %v532 = vmul.f32 %v517, %v525
          %v533 = vmul.f32 %v518, %v525
          %v534 = vmul.f32 %v519, %v525
          %v535 = vld [vmem:[%s2] sm:$0x1]
          %v537 = vlaneseq
          %v538 = vshrl.u32 %v537, 7
          %v539 = vsub.s32 0, %v538
          %v540 = vrot.slane %v535, %v539
          %v542 = vadd.f32 %v527, %v540
          %v543 = vadd.f32 %v528, %v540
          %v544 = vadd.f32 %v529, %v540
          %v545 = vadd.f32 %v530, %v540
          %v546 = vadd.f32 %v531, %v540
          %v547 = vadd.f32 %v532, %v540
          %v548 = vadd.f32 %v533, %v540
          %v549 = vadd.f32 %v534, %v540
          %v550 = vpack.c.bf16 %v543, %v542
          %v551 = vpack.c.bf16 %v545, %v544
          %v552 = vpack.c.bf16 %v547, %v546
          %v553 = vpack.c.bf16 %v549, %v548
          %554 = vst [vmem:[#allocation2] sm:$0xff] %v550
          %555 = vst [vmem:[#allocation2 + $0x8] sm:$0xff] %v551
          %556 = vst [vmem:[#allocation2 + $0x10] sm:$0xff] %v552
          %557 = vst [vmem:[#allocation2 + $0x18] sm:$0xff] %v553
          %v558 = vld [vmem:[#allocation10] sm:$0xf]
          %v559 = vld [vmem:[#allocation10 + $0x4] sm:$0xf]
          %v560 = vld [vmem:[#allocation10 + $0x8] sm:$0xf]
          %v561 = vld [vmem:[#allocation10 + $0xc] sm:$0xf]
          %v562 = vld [vmem:[#allocation10 + $0x10] sm:$0xf]
          %v563 = vld [vmem:[#allocation10 + $0x14] sm:$0xf]
          %v564 = vld [vmem:[#allocation10 + $0x18] sm:$0xf]
          %v565 = vld [vmem:[#allocation10 + $0x1c] sm:$0xf]
          %v566 = vld [vmem:[#allocation10 + $0x20] sm:$0xf]
          %v567 = vld [vmem:[#allocation10 + $0x24] sm:$0xf]
          %v568 = vld [vmem:[#allocation10 + $0x28] sm:$0xf]
          %v569 = vld [vmem:[#allocation10 + $0x2c] sm:$0xf]
          %v570 = vld [vmem:[#allocation10 + $0x30] sm:$0xf]
          %v571 = vld [vmem:[#allocation10 + $0x34] sm:$0xf]
          %v572 = vld [vmem:[#allocation10 + $0x38] sm:$0xf]
          %v573 = vld [vmem:[#allocation10 + $0x3c] sm:$0xf]
          %v574 = vld [vmem:[%s7] sm:$0x1]
          %v576 = vlaneseq
          %v577 = vshrl.u32 %v576, 7
          %v578 = vsub.s32 0, %v577
          %v579 = vrot.slane %v574, %v578
          %v597 = vunpack.c.l.b16 %v558
          %v598 = vunpack.c.l.b16 %v559
          %v599 = vunpack.c.l.b16 %v560
          %v600 = vunpack.c.l.b16 %v561
          %v601 = vunpack.c.l.b16 %v562
          %v602 = vunpack.c.l.b16 %v563
          %v603 = vunpack.c.l.b16 %v564
          %v604 = vunpack.c.l.b16 %v565
          %v605 = vunpack.c.l.b16 %v566
          %v606 = vunpack.c.l.b16 %v567
          %v607 = vunpack.c.l.b16 %v568
          %v608 = vunpack.c.l.b16 %v569
          %v609 = vunpack.c.l.b16 %v570
          %v610 = vunpack.c.l.b16 %v571
          %v611 = vunpack.c.l.b16 %v572
          %v612 = vunpack.c.l.b16 %v573
          %v613 = vpack.c.b16 %v598, %v597
          %v614 = vpack.c.b16 %v600, %v599
          %v615 = vpack.c.b16 %v602, %v601
          %v616 = vpack.c.b16 %v604, %v603
          %v617 = vpack.c.b16 %v606, %v605
          %v618 = vpack.c.b16 %v608, %v607
          %v619 = vpack.c.b16 %v610, %v609
          %v620 = vpack.c.b16 %v612, %v611
          %629 = vmatprep.subr.bf16.mxu0 0
          %630 = vmatpush1.bf16.msra.mxu0 %v613
          %631 = vmatprep.subr.bf16.mxu0 0
          %632 = vmatpush1.bf16.msra.mxu0 %v614
          %633 = vmatprep.subr.bf16.mxu0 0
          %634 = vmatpush1.bf16.msra.mxu0 %v615
          %635 = vmatprep.subr.bf16.mxu0 0
          %636 = vmatpush1.bf16.msra.mxu0 %v616
          %637 = vmatprep.subr.bf16.mxu0 0
          %638 = vmatpush1.bf16.msra.mxu0 %v617
          %639 = vmatprep.subr.bf16.mxu0 0
          %640 = vmatpush1.bf16.msra.mxu0 %v618
          %641 = vmatprep.subr.bf16.mxu0 0
          %642 = vmatpush1.bf16.msra.mxu0 %v619
          %643 = vmatprep.subr.bf16.mxu0 0
          %644 = vmatpush1.bf16.msra.mxu0 %v620
          %645 = vmatprep.subr.bf16.mxu0 0
          %646 = vmatpush1.bf16.msra.mxu0 0
          %647 = vmatprep.subr.bf16.mxu0 0
          %648 = vmatpush1.bf16.msra.mxu0 0
          %649 = vmatprep.subr.bf16.mxu0 0
          %650 = vmatpush1.bf16.msra.mxu0 0
          %651 = vmatprep.subr.bf16.mxu0 0
          %652 = vmatpush1.bf16.msra.mxu0 0
          %653 = vmatprep.subr.bf16.mxu0 0
          %654 = vmatpush1.bf16.msra.mxu0 0
          %655 = vmatprep.subr.bf16.mxu0 0
          %656 = vmatpush1.bf16.msra.mxu0 0
          %657 = vmatprep.subr.bf16.mxu0 0
          %658 = vmatpush1.bf16.msra.mxu0 0
          %659 = vmatprep.subr.bf16.mxu0 0
          %660 = vmatpush1.bf16.msra.mxu0 0
          %661 = vmatprep.mubr.bf16.mxu0 0
          %662 = vmatmul.mubr.bf16.gmra.mrb[0].mxu0 %v550
          %v663 = vpop.f32.mrb[0].mxu0
          %v664 = vadd.f32 %v579, %v663
          %v665 = vpop.f32.mrb[0].mxu0
          %v666 = vpop.f32.mrb[0].mxu0
          %v667 = vadd.f32 %v579, %v666
          %v668 = vpop.f32.mrb[0].mxu0
          %669 = vmatprep.mubr.bf16.mxu0 0
          %670 = vmatmul.mubr.bf16.gmra.mrb[0].mxu0 %v551
          %v671 = vpop.f32.mrb[0].mxu0
          %v672 = vadd.f32 %v579, %v671
          %v673 = vpop.f32.mrb[0].mxu0
          %v674 = vpop.f32.mrb[0].mxu0
          %v675 = vadd.f32 %v579, %v674
          %v676 = vpop.f32.mrb[0].mxu0
          %677 = vmatprep.mubr.bf16.mxu0 0
          %678 = vmatmul.mubr.bf16.gmra.mrb[0].mxu0 %v552
          %v679 = vpop.f32.mrb[0].mxu0
          %v680 = vadd.f32 %v579, %v679
          %v681 = vpop.f32.mrb[0].mxu0
          %v682 = vpop.f32.mrb[0].mxu0
          %v683 = vadd.f32 %v579, %v682
          %v684 = vpop.f32.mrb[0].mxu0
          %685 = vmatprep.mubr.bf16.mxu0 0
          %686 = vmatmul.mubr.bf16.gmra.mrb[0].mxu0 %v553
          %v687 = vpop.f32.mrb[0].mxu0
          %v688 = vadd.f32 %v579, %v687
          %v689 = vpop.f32.mrb[0].mxu0
          %v690 = vpop.f32.mrb[0].mxu0
          %v691 = vadd.f32 %v579, %v690
          %v692 = vpop.f32.mrb[0].mxu0
          %693 = vdwg.mxu0
          %694 = vst [vmem:[#allocation3] sm:$0xff] %v664
          %695 = vst [vmem:[#allocation3 + $0x8] sm:$0xff] %v667
          %696 = vst [vmem:[#allocation3 + $0x10] sm:$0xff] %v672
          %697 = vst [vmem:[#allocation3 + $0x18] sm:$0xff] %v675
          %698 = vst [vmem:[#allocation3 + $0x20] sm:$0xff] %v680
          %699 = vst [vmem:[#allocation3 + $0x28] sm:$0xff] %v683
          %700 = vst [vmem:[#allocation3 + $0x30] sm:$0xff] %v688
          %701 = vst [vmem:[#allocation3 + $0x38] sm:$0xff] %v691
        $region72: #{tpu_custom_call.1} parent=51 // pred_fallthru
          _
        %v702 = vld [vmem:[#allocation2] sm:$0xff]
        %v703 = vld [vmem:[#allocation2 + $0x8] sm:$0xff]
        %v704 = vld [vmem:[#allocation2 + $0x10] sm:$0xff]
        %v705 = vld [vmem:[#allocation2 + $0x18] sm:$0xff]
        %v706 = vld [vmem:[#allocation7] sm:$0xff]
        %v707 = vld [vmem:[#allocation7 + $0x8] sm:$0xf]
        %v708 = vld [vmem:[#allocation7 + $0xc] sm:$0xff]
        %v709 = vld [vmem:[#allocation7 + $0x14] sm:$0xf]
        %v710 = vld [vmem:[#allocation7 + $0x18] sm:$0xff]
        %v711 = vld [vmem:[#allocation7 + $0x20] sm:$0xf]
        %v712 = vld [vmem:[#allocation7 + $0x24] sm:$0xff]
        %v713 = vld [vmem:[#allocation7 + $0x2c] sm:$0xf]
        %v714 = vld [vmem:[#allocation7 + $0x30] sm:$0xff]
        %v715 = vld [vmem:[#allocation7 + $0x38] sm:$0xf]
        %v716 = vld [vmem:[#allocation7 + $0x3c] sm:$0xff]
        %v717 = vld [vmem:[#allocation7 + $0x44] sm:$0xf]
        %v718 = vld [vmem:[#allocation7 + $0x48] sm:$0xff]
        %v719 = vld [vmem:[#allocation7 + $0x50] sm:$0xf]
        %v720 = vld [vmem:[#allocation7 + $0x54] sm:$0xff]
        %v721 = vld [vmem:[#allocation7 + $0x5c] sm:$0xf]
        %v722 = vld [vmem:[#allocation7 + $0x60] sm:$0xff]
        %v723 = vld [vmem:[#allocation7 + $0x68] sm:$0xf]
        %v724 = vld [vmem:[#allocation7 + $0x6c] sm:$0xff]
        %v725 = vld [vmem:[#allocation7 + $0x74] sm:$0xf]
        %v726 = vld [vmem:[#allocation7 + $0x78] sm:$0xff]
        %v727 = vld [vmem:[#allocation7 + $0x80] sm:$0xf]
        %v728 = vld [vmem:[#allocation7 + $0x84] sm:$0xff]
        %v729 = vld [vmem:[#allocation7 + $0x8c] sm:$0xf]
        %v730 = vld [vmem:[#allocation7 + $0x90] sm:$0xff]
        %v731 = vld [vmem:[#allocation7 + $0x98] sm:$0xf]
        %v732 = vld [vmem:[#allocation7 + $0x9c] sm:$0xff]
        %v733 = vld [vmem:[#allocation7 + $0xa4] sm:$0xf]
        %v734 = vld [vmem:[#allocation7 + $0xa8] sm:$0xff]
        %v735 = vld [vmem:[#allocation7 + $0xb0] sm:$0xf]
        %v736 = vld [vmem:[#allocation7 + $0xb4] sm:$0xff]
        %v737 = vld [vmem:[#allocation7 + $0xbc] sm:$0xf]
        %v738 = vld [vmem:[%s415] sm:$0x7]
        %v740 = vlaneseq
        %v741 = vshrl.u32 %v740, 7
        %v742 = vsub.s32 0, %v741
        %v743 = vrot.slane %v738, %v742
        %v744 = vlaneseq
        %v745 = vshrl.u32 %v744, 7
        %v746 = vsub.s32 1, %v745
        %v747 = vrot.slane %v738, %v746
        %v748 = vlaneseq
        %v749 = vshrl.u32 %v748, 7
        %v750 = vsub.s32 2, %v749
        %v751 = vrot.slane %v738, %v750
        %v787 = vunpack.c.l.b16 %v706
        %v788 = vunpack.c.h.b16 %v706
        %v789 = vunpack.c.l.b16 %v707
        %v790 = vunpack.c.l.b16 %v708
        %v791 = vunpack.c.h.b16 %v708
        %v792 = vunpack.c.l.b16 %v709
        %v793 = vunpack.c.l.b16 %v710
        %v794 = vunpack.c.h.b16 %v710
        %v795 = vunpack.c.l.b16 %v711
        %v796 = vunpack.c.l.b16 %v712
        %v797 = vunpack.c.h.b16 %v712
        %v798 = vunpack.c.l.b16 %v713
        %v799 = vunpack.c.l.b16 %v714
        %v800 = vunpack.c.h.b16 %v714
        %v801 = vunpack.c.l.b16 %v715
        %v802 = vunpack.c.l.b16 %v716
        %v803 = vunpack.c.h.b16 %v716
        %v804 = vunpack.c.l.b16 %v717
        %v805 = vunpack.c.l.b16 %v718
        %v806 = vunpack.c.h.b16 %v718
        %v807 = vunpack.c.l.b16 %v719
        %v808 = vunpack.c.l.b16 %v720
        %v809 = vunpack.c.h.b16 %v720
        %v810 = vunpack.c.l.b16 %v721
        %v811 = vunpack.c.l.b16 %v722
        %v812 = vunpack.c.h.b16 %v722
        %v813 = vunpack.c.l.b16 %v723
        %v814 = vunpack.c.l.b16 %v724
        %v815 = vunpack.c.h.b16 %v724
        %v816 = vunpack.c.l.b16 %v725
        %v817 = vunpack.c.l.b16 %v726
        %v818 = vunpack.c.h.b16 %v726
        %v819 = vunpack.c.l.b16 %v727
        %v820 = vunpack.c.l.b16 %v728
        %v821 = vunpack.c.h.b16 %v728
        %v822 = vunpack.c.l.b16 %v729
        %v823 = vunpack.c.l.b16 %v730
        %v824 = vunpack.c.h.b16 %v730
        %v825 = vunpack.c.l.b16 %v731
        %v826 = vunpack.c.l.b16 %v732
        %v827 = vunpack.c.h.b16 %v732
        %v828 = vunpack.c.l.b16 %v733
        %v829 = vunpack.c.l.b16 %v734
        %v830 = vunpack.c.h.b16 %v734
        %v831 = vunpack.c.l.b16 %v735
        %v832 = vunpack.c.l.b16 %v736
        %v833 = vunpack.c.h.b16 %v736
        %v834 = vunpack.c.l.b16 %v737
        %v835 = vpack.c.b16 %v790, %v787
        %v836 = vpack.c.b16 %v791, %v788
        %v837 = vpack.c.b16 %v792, %v789
        %v838 = vpack.c.b16 %v796, %v793
        %v839 = vpack.c.b16 %v797, %v794
        %v840 = vpack.c.b16 %v798, %v795
        %v841 = vpack.c.b16 %v802, %v799
        %v842 = vpack.c.b16 %v803, %v800
        %v843 = vpack.c.b16 %v804, %v801
        %v844 = vpack.c.b16 %v808, %v805
        %v845 = vpack.c.b16 %v809, %v806
        %v846 = vpack.c.b16 %v810, %v807
        %v847 = vpack.c.b16 %v814, %v811
        %v848 = vpack.c.b16 %v815, %v812
        %v849 = vpack.c.b16 %v816, %v813
        %v850 = vpack.c.b16 %v820, %v817
        %v851 = vpack.c.b16 %v821, %v818
        %v852 = vpack.c.b16 %v822, %v819
        %v853 = vpack.c.b16 %v826, %v823
        %v854 = vpack.c.b16 %v827, %v824
        %v855 = vpack.c.b16 %v828, %v825
        %v856 = vpack.c.b16 %v832, %v829
        %v857 = vpack.c.b16 %v833, %v830
        %v858 = vpack.c.b16 %v834, %v831
        %883 = vmatprep.subr.bf16.mxu0 %v836
        %884 = vmatpush1.bf16.msra.mxu0 %v835
        %885 = vmatprep.subr.bf16.mxu0 %v839
        %886 = vmatpush1.bf16.msra.mxu0 %v838
        %887 = vmatprep.subr.bf16.mxu0 %v842
        %888 = vmatpush1.bf16.msra.mxu0 %v841
        %889 = vmatprep.subr.bf16.mxu0 %v845
        %890 = vmatpush1.bf16.msra.mxu0 %v844
        %891 = vmatprep.subr.bf16.mxu0 %v848
        %892 = vmatpush1.bf16.msra.mxu0 %v847
        %893 = vmatprep.subr.bf16.mxu0 %v851
        %894 = vmatpush1.bf16.msra.mxu0 %v850
        %895 = vmatprep.subr.bf16.mxu0 %v854
        %896 = vmatpush1.bf16.msra.mxu0 %v853
        %897 = vmatprep.subr.bf16.mxu0 %v857
        %898 = vmatpush1.bf16.msra.mxu0 %v856
        %899 = vmatprep.subr.bf16.mxu0 0
        %900 = vmatpush1.bf16.msra.mxu0 0
        %901 = vmatprep.subr.bf16.mxu0 0
        %902 = vmatpush1.bf16.msra.mxu0 0
        %903 = vmatprep.subr.bf16.mxu0 0
        %904 = vmatpush1.bf16.msra.mxu0 0
        %905 = vmatprep.subr.bf16.mxu0 0
        %906 = vmatpush1.bf16.msra.mxu0 0
        %907 = vmatprep.subr.bf16.mxu0 0
        %908 = vmatpush1.bf16.msra.mxu0 0
        %909 = vmatprep.subr.bf16.mxu0 0
        %910 = vmatpush1.bf16.msra.mxu0 0
        %911 = vmatprep.subr.bf16.mxu0 0
        %912 = vmatpush1.bf16.msra.mxu0 0
        %913 = vmatprep.subr.bf16.mxu0 0
        %914 = vmatpush1.bf16.msra.mxu0 0
        %915 = vmatprep.mubr.bf16.mxu0 0
        %916 = vmatmul.mubr.bf16.gmra.mrb[0].mxu0 %v702
        %v917 = vpop.f32.mrb[0].mxu0
        %v918 = vadd.f32 %v743, %v917
        %v919 = vpop.f32.mrb[0].mxu0
        %v920 = vadd.f32 %v747, %v919
        %v921 = vpop.f32.mrb[0].mxu0
        %v922 = vadd.f32 %v743, %v921
        %v923 = vpop.f32.mrb[0].mxu0
        %v924 = vadd.f32 %v747, %v923
        %925 = vmatprep.mubr.bf16.mxu0 0
        %926 = vmatmul.mubr.bf16.gmra.mrb[0].mxu0 %v703
        %v927 = vpop.f32.mrb[0].mxu0
        %v928 = vadd.f32 %v743, %v927
        %v929 = vpop.f32.mrb[0].mxu0
        %v930 = vadd.f32 %v747, %v929
        %v931 = vpop.f32.mrb[0].mxu0
        %v932 = vadd.f32 %v743, %v931
        %v933 = vpop.f32.mrb[0].mxu0
        %v934 = vadd.f32 %v747, %v933
        %935 = vmatprep.mubr.bf16.mxu0 0
        %936 = vmatmul.mubr.bf16.gmra.mrb[0].mxu0 %v704
        %v937 = vpop.f32.mrb[0].mxu0
        %v938 = vadd.f32 %v743, %v937
        %v939 = vpop.f32.mrb[0].mxu0
        %v940 = vadd.f32 %v747, %v939
        %v941 = vpop.f32.mrb[0].mxu0
        %v942 = vadd.f32 %v743, %v941
        %v943 = vpop.f32.mrb[0].mxu0
        %v944 = vadd.f32 %v747, %v943
        %945 = vmatprep.mubr.bf16.mxu0 0
        %946 = vmatmul.mubr.bf16.gmra.mrb[0].mxu0 %v705
        %v947 = vpop.f32.mrb[0].mxu0
        %v948 = vadd.f32 %v743, %v947
        %v949 = vpop.f32.mrb[0].mxu0
        %v950 = vadd.f32 %v747, %v949
        %v951 = vpop.f32.mrb[0].mxu0
        %v952 = vadd.f32 %v743, %v951
        %v953 = vpop.f32.mrb[0].mxu0
        %v954 = vadd.f32 %v747, %v953
        %955 = vdwg.mxu0
        %956 = vmatprep.subr.bf16.mxu0 0
        %957 = vmatpush1.bf16.msra.mxu0 %v837
        %958 = vmatprep.subr.bf16.mxu0 0
        %959 = vmatpush1.bf16.msra.mxu0 %v840
        %960 = vmatprep.subr.bf16.mxu0 0
        %961 = vmatpush1.bf16.msra.mxu0 %v843
        %962 = vmatprep.subr.bf16.mxu0 0
        %963 = vmatpush1.bf16.msra.mxu0 %v846
        %964 = vmatprep.subr.bf16.mxu0 0
        %965 = vmatpush1.bf16.msra.mxu0 %v849
        %966 = vmatprep.subr.bf16.mxu0 0
        %967 = vmatpush1.bf16.msra.mxu0 %v852
        %968 = vmatprep.subr.bf16.mxu0 0
        %969 = vmatpush1.bf16.msra.mxu0 %v855
        %970 = vmatprep.subr.bf16.mxu0 0
        %971 = vmatpush1.bf16.msra.mxu0 %v858
        %972 = vmatprep.subr.bf16.mxu0 0
        %973 = vmatpush1.bf16.msra.mxu0 0
        %974 = vmatprep.subr.bf16.mxu0 0
        %975 = vmatpush1.bf16.msra.mxu0 0
        %976 = vmatprep.subr.bf16.mxu0 0
        %977 = vmatpush1.bf16.msra.mxu0 0
        %978 = vmatprep.subr.bf16.mxu0 0
        %979 = vmatpush1.bf16.msra.mxu0 0
        %980 = vmatprep.subr.bf16.mxu0 0
        %981 = vmatpush1.bf16.msra.mxu0 0
        %982 = vmatprep.subr.bf16.mxu0 0
        %983 = vmatpush1.bf16.msra.mxu0 0
        %984 = vmatprep.subr.bf16.mxu0 0
        %985 = vmatpush1.bf16.msra.mxu0 0
        %986 = vmatprep.subr.bf16.mxu0 0
        %987 = vmatpush1.bf16.msra.mxu0 0
        %988 = vmatprep.mubr.bf16.mxu0 0
        %989 = vmatmul.mubr.bf16.gmra.mrb[0].mxu0 %v702
        %v990 = vpop.f32.mrb[0].mxu0
        %v991 = vadd.f32 %v751, %v990
        %v992 = vpop.f32.mrb[0].mxu0
        %v993 = vpop.f32.mrb[0].mxu0
        %v994 = vadd.f32 %v751, %v993
        %v995 = vpop.f32.mrb[0].mxu0
        %996 = vmatprep.mubr.bf16.mxu0 0
        %997 = vmatmul.mubr.bf16.gmra.mrb[0].mxu0 %v703
        %v998 = vpop.f32.mrb[0].mxu0
        %v999 = vadd.f32 %v751, %v998
        %v1000 = vpop.f32.mrb[0].mxu0
        %v1001 = vpop.f32.mrb[0].mxu0
        %v1002 = vadd.f32 %v751, %v1001
        %v1003 = vpop.f32.mrb[0].mxu0
        %1004 = vmatprep.mubr.bf16.mxu0 0
        %1005 = vmatmul.mubr.bf16.gmra.mrb[0].mxu0 %v704
        %v1006 = vpop.f32.mrb[0].mxu0
        %v1007 = vadd.f32 %v751, %v1006
        %v1008 = vpop.f32.mrb[0].mxu0
        %v1009 = vpop.f32.mrb[0].mxu0
        %v1010 = vadd.f32 %v751, %v1009
        %v1011 = vpop.f32.mrb[0].mxu0
        %1012 = vmatprep.mubr.bf16.mxu0 0
        %1013 = vmatmul.mubr.bf16.gmra.mrb[0].mxu0 %v705
        %v1014 = vpop.f32.mrb[0].mxu0
        %v1015 = vadd.f32 %v751, %v1014
        %v1016 = vpop.f32.mrb[0].mxu0
        %v1017 = vpop.f32.mrb[0].mxu0
        %v1018 = vadd.f32 %v751, %v1017
        %v1019 = vpop.f32.mrb[0].mxu0
        %1020 = vdwg.mxu0
        %v1021 = vmax.f32 %v918, 0.0
        %v1022 = vmax.f32 %v920, 0.0
        %v1023 = vmax.f32 %v991, 0.0
        %v1024 = vmax.f32 %v922, 0.0
        %v1025 = vmax.f32 %v924, 0.0
        %v1026 = vmax.f32 %v994, 0.0
        %v1027 = vmax.f32 %v928, 0.0
        %v1028 = vmax.f32 %v930, 0.0
        %v1029 = vmax.f32 %v999, 0.0
        %v1030 = vmax.f32 %v932, 0.0
        %v1031 = vmax.f32 %v934, 0.0
        %v1032 = vmax.f32 %v1002, 0.0
        %v1033 = vmax.f32 %v938, 0.0
        %v1034 = vmax.f32 %v940, 0.0
        %v1035 = vmax.f32 %v1007, 0.0
        %v1036 = vmax.f32 %v942, 0.0
        %v1037 = vmax.f32 %v944, 0.0
        %v1038 = vmax.f32 %v1010, 0.0
        %v1039 = vmax.f32 %v948, 0.0
        %v1040 = vmax.f32 %v950, 0.0
        %v1041 = vmax.f32 %v1015, 0.0
        %v1042 = vmax.f32 %v952, 0.0
        %v1043 = vmax.f32 %v954, 0.0
        %v1044 = vmax.f32 %v1018, 0.0
        %v1045 = vpack.c.bf16 %v1024, %v1021
        %v1046 = vpack.c.bf16 %v1025, %v1022
        %v1047 = vpack.c.bf16 %v1026, %v1023
        %v1048 = vpack.c.bf16 %v1030, %v1027
        %v1049 = vpack.c.bf16 %v1031, %v1028
        %v1050 = vpack.c.bf16 %v1032, %v1029
        %v1051 = vpack.c.bf16 %v1036, %v1033
        %v1052 = vpack.c.bf16 %v1037, %v1034
        %v1053 = vpack.c.bf16 %v1038, %v1035
        %v1054 = vpack.c.bf16 %v1042, %v1039
        %v1055 = vpack.c.bf16 %v1043, %v1040
        %v1056 = vpack.c.bf16 %v1044, %v1041
        %v1057 = vld [vmem:[#allocation3] sm:$0xff]
        %v1058 = vld [vmem:[#allocation3 + $0x8] sm:$0xff]
        %v1059 = vld [vmem:[#allocation3 + $0x10] sm:$0xff]
        %v1060 = vld [vmem:[#allocation3 + $0x18] sm:$0xff]
        %v1061 = vld [vmem:[#allocation3 + $0x20] sm:$0xff]
        %v1062 = vld [vmem:[#allocation3 + $0x28] sm:$0xff]
        %v1063 = vld [vmem:[#allocation3 + $0x30] sm:$0xff]
        %v1064 = vld [vmem:[#allocation3 + $0x38] sm:$0xff]
        %v1065 = vld [vmem:[#allocation9] sm:$0xf]
        %v1066 = vld [vmem:[#allocation9 + $0x4] sm:$0xf]
        %v1067 = vld [vmem:[#allocation9 + $0x8] sm:$0xf]
        %v1068 = vld [vmem:[#allocation9 + $0xc] sm:$0xf]
        %v1069 = vld [vmem:[#allocation9 + $0x10] sm:$0xf]
        %v1070 = vld [vmem:[#allocation9 + $0x14] sm:$0xf]
        %v1071 = vld [vmem:[#allocation9 + $0x18] sm:$0xf]
        %v1072 = vld [vmem:[#allocation9 + $0x1c] sm:$0xf]
        %v1073 = vld [vmem:[#allocation9 + $0x20] sm:$0xf]
        %v1074 = vld [vmem:[#allocation9 + $0x24] sm:$0xf]
        %v1075 = vld [vmem:[#allocation9 + $0x28] sm:$0xf]
        %v1076 = vld [vmem:[#allocation9 + $0x2c] sm:$0xf]
        %v1077 = vld [vmem:[#allocation9 + $0x30] sm:$0xf]
        %v1078 = vld [vmem:[#allocation9 + $0x34] sm:$0xf]
        %v1079 = vld [vmem:[#allocation9 + $0x38] sm:$0xf]
        %v1080 = vld [vmem:[#allocation9 + $0x3c] sm:$0xf]
        %v1081 = vld [vmem:[#allocation9 + $0x40] sm:$0xf]
        %v1082 = vld [vmem:[#allocation9 + $0x44] sm:$0xf]
        %v1083 = vld [vmem:[#allocation9 + $0x48] sm:$0xf]
        %v1084 = vld [vmem:[#allocation9 + $0x4c] sm:$0xf]
        %v1085 = vld [vmem:[#allocation9 + $0x50] sm:$0xf]
        %v1086 = vld [vmem:[#allocation9 + $0x54] sm:$0xf]
        %v1087 = vld [vmem:[#allocation9 + $0x58] sm:$0xf]
        %v1088 = vld [vmem:[#allocation9 + $0x5c] sm:$0xf]
        %v1089 = vld [vmem:[#allocation9 + $0x60] sm:$0xf]
        %v1090 = vld [vmem:[#allocation9 + $0x64] sm:$0xf]
        %v1091 = vld [vmem:[#allocation9 + $0x68] sm:$0xf]
        %v1092 = vld [vmem:[#allocation9 + $0x6c] sm:$0xf]
        %v1093 = vld [vmem:[#allocation9 + $0x70] sm:$0xf]
        %v1094 = vld [vmem:[#allocation9 + $0x74] sm:$0xf]
        %v1095 = vld [vmem:[#allocation9 + $0x78] sm:$0xf]
        %v1096 = vld [vmem:[#allocation9 + $0x7c] sm:$0xf]
        %v1097 = vld [vmem:[#allocation9 + $0x80] sm:$0xf]
        %v1098 = vld [vmem:[#allocation9 + $0x84] sm:$0xf]
        %v1099 = vld [vmem:[#allocation9 + $0x88] sm:$0xf]
        %v1100 = vld [vmem:[#allocation9 + $0x8c] sm:$0xf]
        %v1101 = vld [vmem:[#allocation9 + $0x90] sm:$0xf]
        %v1102 = vld [vmem:[#allocation9 + $0x94] sm:$0xf]
        %v1103 = vld [vmem:[#allocation9 + $0x98] sm:$0xf]
        %v1104 = vld [vmem:[#allocation9 + $0x9c] sm:$0xf]
        %v1105 = vld [vmem:[#allocation9 + $0xa0] sm:$0xf]
        %v1106 = vld [vmem:[#allocation9 + $0xa4] sm:$0xf]
        %v1107 = vld [vmem:[#allocation9 + $0xa8] sm:$0xf]
        %v1108 = vld [vmem:[#allocation9 + $0xac] sm:$0xf]
        %v1109 = vld [vmem:[#allocation9 + $0xb0] sm:$0xf]
        %v1110 = vld [vmem:[#allocation9 + $0xb4] sm:$0xf]
        %v1111 = vld [vmem:[#allocation9 + $0xb8] sm:$0xf]
        %v1112 = vld [vmem:[#allocation9 + $0xbc] sm:$0xf]
        %v1161 = vunpack.c.l.b16 %v1065
        %v1162 = vunpack.c.l.b16 %v1066
        %v1163 = vunpack.c.l.b16 %v1067
        %v1164 = vunpack.c.l.b16 %v1068
        %v1165 = vunpack.c.l.b16 %v1069
        %v1166 = vunpack.c.l.b16 %v1070
        %v1167 = vunpack.c.l.b16 %v1071
        %v1168 = vunpack.c.l.b16 %v1072
        %v1169 = vunpack.c.l.b16 %v1073
        %v1170 = vunpack.c.l.b16 %v1074
        %v1171 = vunpack.c.l.b16 %v1075
        %v1172 = vunpack.c.l.b16 %v1076
        %v1173 = vunpack.c.l.b16 %v1077
        %v1174 = vunpack.c.l.b16 %v1078
        %v1175 = vunpack.c.l.b16 %v1079
        %v1176 = vunpack.c.l.b16 %v1080
        %v1177 = vunpack.c.l.b16 %v1081
        %v1178 = vunpack.c.l.b16 %v1082
        %v1179 = vunpack.c.l.b16 %v1083
        %v1180 = vunpack.c.l.b16 %v1084
        %v1181 = vunpack.c.l.b16 %v1085
        %v1182 = vunpack.c.l.b16 %v1086
        %v1183 = vunpack.c.l.b16 %v1087
        %v1184 = vunpack.c.l.b16 %v1088
        %v1185 = vunpack.c.l.b16 %v1089
        %v1186 = vunpack.c.l.b16 %v1090
        %v1187 = vunpack.c.l.b16 %v1091
        %v1188 = vunpack.c.l.b16 %v1092
        %v1189 = vunpack.c.l.b16 %v1093
        %v1190 = vunpack.c.l.b16 %v1094
        %v1191 = vunpack.c.l.b16 %v1095
        %v1192 = vunpack.c.l.b16 %v1096
        %v1193 = vunpack.c.l.b16 %v1097
        %v1194 = vunpack.c.l.b16 %v1098
        %v1195 = vunpack.c.l.b16 %v1099
        %v1196 = vunpack.c.l.b16 %v1100
        %v1197 = vunpack.c.l.b16 %v1101
        %v1198 = vunpack.c.l.b16 %v1102
        %v1199 = vunpack.c.l.b16 %v1103
        %v1200 = vunpack.c.l.b16 %v1104
        %v1201 = vunpack.c.l.b16 %v1105
        %v1202 = vunpack.c.l.b16 %v1106
        %v1203 = vunpack.c.l.b16 %v1107
        %v1204 = vunpack.c.l.b16 %v1108
        %v1205 = vunpack.c.l.b16 %v1109
        %v1206 = vunpack.c.l.b16 %v1110
        %v1207 = vunpack.c.l.b16 %v1111
        %v1208 = vunpack.c.l.b16 %v1112
        %v1209 = vpack.c.b16 %v1162, %v1161
        %v1210 = vpack.c.b16 %v1164, %v1163
        %v1211 = vpack.c.b16 %v1166, %v1165
        %v1212 = vpack.c.b16 %v1168, %v1167
        %v1213 = vpack.c.b16 %v1170, %v1169
        %v1214 = vpack.c.b16 %v1172, %v1171
        %v1215 = vpack.c.b16 %v1174, %v1173
        %v1216 = vpack.c.b16 %v1176, %v1175
        %v1217 = vpack.c.b16 %v1178, %v1177
        %v1218 = vpack.c.b16 %v1180, %v1179
        %v1219 = vpack.c.b16 %v1182, %v1181
        %v1220 = vpack.c.b16 %v1184, %v1183
        %v1221 = vpack.c.b16 %v1186, %v1185
        %v1222 = vpack.c.b16 %v1188, %v1187
        %v1223 = vpack.c.b16 %v1190, %v1189
        %v1224 = vpack.c.b16 %v1192, %v1191
        %v1225 = vpack.c.b16 %v1194, %v1193
        %v1226 = vpack.c.b16 %v1196, %v1195
        %v1227 = vpack.c.b16 %v1198, %v1197
        %v1228 = vpack.c.b16 %v1200, %v1199
        %v1229 = vpack.c.b16 %v1202, %v1201
        %v1230 = vpack.c.b16 %v1204, %v1203
        %v1231 = vpack.c.b16 %v1206, %v1205
        %v1232 = vpack.c.b16 %v1208, %v1207
        %1257 = vmatprep.subr.bf16.mxu0 0
        %1258 = vmatpush1.bf16.msra.mxu0 %v1209
        %1259 = vmatprep.subr.bf16.mxu0 0
        %1260 = vmatpush1.bf16.msra.mxu0 %v1210
        %1261 = vmatprep.subr.bf16.mxu0 0
        %1262 = vmatpush1.bf16.msra.mxu0 %v1211
        %1263 = vmatprep.subr.bf16.mxu0 0
        %1264 = vmatpush1.bf16.msra.mxu0 %v1212
        %1265 = vmatprep.subr.bf16.mxu0 0
        %1266 = vmatpush1.bf16.msra.mxu0 %v1213
        %1267 = vmatprep.subr.bf16.mxu0 0
        %1268 = vmatpush1.bf16.msra.mxu0 %v1214
        %1269 = vmatprep.subr.bf16.mxu0 0
        %1270 = vmatpush1.bf16.msra.mxu0 %v1215
        %1271 = vmatprep.subr.bf16.mxu0 0
        %1272 = vmatpush1.bf16.msra.mxu0 %v1216
        %1273 = vmatprep.subr.bf16.mxu0 0
        %1274 = vmatpush1.bf16.msra.mxu0 %v1217
        %1275 = vmatprep.subr.bf16.mxu0 0
        %1276 = vmatpush1.bf16.msra.mxu0 %v1218
        %1277 = vmatprep.subr.bf16.mxu0 0
        %1278 = vmatpush1.bf16.msra.mxu0 %v1219
        %1279 = vmatprep.subr.bf16.mxu0 0
        %1280 = vmatpush1.bf16.msra.mxu0 %v1220
        %1281 = vmatprep.subr.bf16.mxu0 0
        %1282 = vmatpush1.bf16.msra.mxu0 %v1221
        %1283 = vmatprep.subr.bf16.mxu0 0
        %1284 = vmatpush1.bf16.msra.mxu0 %v1222
        %1285 = vmatprep.subr.bf16.mxu0 0
        %1286 = vmatpush1.bf16.msra.mxu0 %v1223
        %1287 = vmatprep.subr.bf16.mxu0 0
        %1288 = vmatpush1.bf16.msra.mxu0 %v1224
        %1289 = vmatprep.mubr.bf16.mxu0 %v1046
        %1290 = vmatmul.mubr.bf16.gmra.mrb[0].mxu0 %v1045
        %v1291 = vpop.f32.mrb[0].mxu0
        %v1292 = vadd.f32 0.0, %v1291
        %v1293 = vpop.f32.mrb[0].mxu0
        %v1294 = vpop.f32.mrb[0].mxu0
        %v1295 = vadd.f32 0.0, %v1294
        %v1296 = vpop.f32.mrb[0].mxu0
        %1297 = vmatprep.mubr.bf16.mxu0 %v1049
        %1298 = vmatmul.mubr.bf16.gmra.mrb[0].mxu0 %v1048
        %v1299 = vpop.f32.mrb[0].mxu0
        %v1300 = vadd.f32 0.0, %v1299
        %v1301 = vpop.f32.mrb[0].mxu0
        %v1302 = vpop.f32.mrb[0].mxu0
        %v1303 = vadd.f32 0.0, %v1302
        %v1304 = vpop.f32.mrb[0].mxu0
        %1305 = vmatprep.mubr.bf16.mxu0 %v1052
        %1306 = vmatmul.mubr.bf16.gmra.mrb[0].mxu0 %v1051
        %v1307 = vpop.f32.mrb[0].mxu0
        %v1308 = vadd.f32 0.0, %v1307
        %v1309 = vpop.f32.mrb[0].mxu0
        %v1310 = vpop.f32.mrb[0].mxu0
        %v1311 = vadd.f32 0.0, %v1310
        %v1312 = vpop.f32.mrb[0].mxu0
        %1313 = vmatprep.mubr.bf16.mxu0 %v1055
        %1314 = vmatmul.mubr.bf16.gmra.mrb[0].mxu0 %v1054
        %v1315 = vpop.f32.mrb[0].mxu0
        %v1316 = vadd.f32 0.0, %v1315
        %v1317 = vpop.f32.mrb[0].mxu0
        %v1318 = vpop.f32.mrb[0].mxu0
        %v1319 = vadd.f32 0.0, %v1318
        %v1320 = vpop.f32.mrb[0].mxu0
        %1321 = vdwg.mxu0
        %1322 = vmatprep.subr.bf16.mxu0 0
        %1323 = vmatpush1.bf16.msra.mxu0 %v1225
        %1324 = vmatprep.subr.bf16.mxu0 0
        %1325 = vmatpush1.bf16.msra.mxu0 %v1226
        %1326 = vmatprep.subr.bf16.mxu0 0
        %1327 = vmatpush1.bf16.msra.mxu0 %v1227
        %1328 = vmatprep.subr.bf16.mxu0 0
        %1329 = vmatpush1.bf16.msra.mxu0 %v1228
        %1330 = vmatprep.subr.bf16.mxu0 0
        %1331 = vmatpush1.bf16.msra.mxu0 %v1229
        %1332 = vmatprep.subr.bf16.mxu0 0
        %1333 = vmatpush1.bf16.msra.mxu0 %v1230
        %1334 = vmatprep.subr.bf16.mxu0 0
        %1335 = vmatpush1.bf16.msra.mxu0 %v1231
        %1336 = vmatprep.subr.bf16.mxu0 0
        %1337 = vmatpush1.bf16.msra.mxu0 %v1232
        %1338 = vmatprep.subr.bf16.mxu0 0
        %1339 = vmatpush1.bf16.msra.mxu0 0
        %1340 = vmatprep.subr.bf16.mxu0 0
        %1341 = vmatpush1.bf16.msra.mxu0 0
        %1342 = vmatprep.subr.bf16.mxu0 0
        %1343 = vmatpush1.bf16.msra.mxu0 0
        %1344 = vmatprep.subr.bf16.mxu0 0
        %1345 = vmatpush1.bf16.msra.mxu0 0
        %1346 = vmatprep.subr.bf16.mxu0 0
        %1347 = vmatpush1.bf16.msra.mxu0 0
        %1348 = vmatprep.subr.bf16.mxu0 0
        %1349 = vmatpush1.bf16.msra.mxu0 0
        %1350 = vmatprep.subr.bf16.mxu0 0
        %1351 = vmatpush1.bf16.msra.mxu0 0
        %1352 = vmatprep.subr.bf16.mxu0 0
        %1353 = vmatpush1.bf16.msra.mxu0 0
        %1354 = vmatprep.mubr.bf16.mxu0 0
        %1355 = vmatmul.mubr.bf16.gmra.mrb[0].mxu0 %v1047
        %v1356 = vpop.f32.mrb[0].mxu0
        %v1357 = vadd.f32 %v1292, %v1356
        %v1358 = vpop.f32.mrb[0].mxu0
        %v1359 = vpop.f32.mrb[0].mxu0
        %v1360 = vadd.f32 %v1295, %v1359
        %v1361 = vpop.f32.mrb[0].mxu0
        %1362 = vmatprep.mubr.bf16.mxu0 0
        %1363 = vmatmul.mubr.bf16.gmra.mrb[0].mxu0 %v1050
        %v1364 = vpop.f32.mrb[0].mxu0
        %v1365 = vadd.f32 %v1300, %v1364
        %v1366 = vpop.f32.mrb[0].mxu0
        %v1367 = vpop.f32.mrb[0].mxu0
        %v1368 = vadd.f32 %v1303, %v1367
        %v1369 = vpop.f32.mrb[0].mxu0
        %1370 = vmatprep.mubr.bf16.mxu0 0
        %1371 = vmatmul.mubr.bf16.gmra.mrb[0].mxu0 %v1053
        %v1372 = vpop.f32.mrb[0].mxu0
        %v1373 = vadd.f32 %v1308, %v1372
        %v1374 = vpop.f32.mrb[0].mxu0
        %v1375 = vpop.f32.mrb[0].mxu0
        %v1376 = vadd.f32 %v1311, %v1375
        %v1377 = vpop.f32.mrb[0].mxu0
        %1378 = vmatprep.mubr.bf16.mxu0 0
        %1379 = vmatmul.mubr.bf16.gmra.mrb[0].mxu0 %v1056
        %v1380 = vpop.f32.mrb[0].mxu0
        %v1381 = vadd.f32 %v1316, %v1380
        %v1382 = vpop.f32.mrb[0].mxu0
        %v1383 = vpop.f32.mrb[0].mxu0
        %v1384 = vadd.f32 %v1319, %v1383
        %v1385 = vpop.f32.mrb[0].mxu0
        %1386 = vdwg.mxu0
        %v1387 = vadd.f32 %v1057, %v1357
        %v1388 = vadd.f32 %v1058, %v1360
        %v1389 = vadd.f32 %v1059, %v1365
        %v1390 = vadd.f32 %v1060, %v1368
        %v1391 = vadd.f32 %v1061, %v1373
        %v1392 = vadd.f32 %v1062, %v1376
        %v1393 = vadd.f32 %v1063, %v1381
        %v1394 = vadd.f32 %v1064, %v1384
        %1395 = vst [vmem:[#allocation3] sm:$0xff] %v1387
        %1396 = vst [vmem:[#allocation3 + $0x8] sm:$0xff] %v1388
        %1397 = vst [vmem:[#allocation3 + $0x10] sm:$0xff] %v1389
        %1398 = vst [vmem:[#allocation3 + $0x18] sm:$0xff] %v1390
        %1399 = vst [vmem:[#allocation3 + $0x20] sm:$0xff] %v1391
        %1400 = vst [vmem:[#allocation3 + $0x28] sm:$0xff] %v1392
        %1401 = vst [vmem:[#allocation3 + $0x30] sm:$0xff] %v1393
        %1402 = vst [vmem:[#allocation3 + $0x38] sm:$0xff] %v1394
        // Predicated region
        $region73: #{tpu_custom_call.1} parent=51 // pred_check
          %p1403 = pneg %p420
        $region74: #{tpu_custom_call.1} parent=51 // pred_check_branch
          %1405 = sbr.rel (%p1403) target = $region76
        $region75: #{tpu_custom_call.1} parent=51 // pred_region
          %v1406 = vld [vmem:[%s361] sm:$0xff]
          %v1407 = vld [vmem:[%s361 + $0x8] sm:$0xff]
          %v1408 = vld [vmem:[%s361 + $0x10] sm:$0xff]
          %v1409 = vld [vmem:[%s361 + $0x18] sm:$0xff]
          %v1410 = vld [vmem:[%s361 + $0x20] sm:$0xff]
          %v1411 = vld [vmem:[%s361 + $0x28] sm:$0xff]
          %v1412 = vld [vmem:[%s361 + $0x30] sm:$0xff]
          %v1413 = vld [vmem:[%s361 + $0x38] sm:$0xff]
          %v1414 = vld [vmem:[#allocation3] sm:$0xff]
          %v1415 = vld [vmem:[#allocation3 + $0x8] sm:$0xff]
          %v1416 = vld [vmem:[#allocation3 + $0x10] sm:$0xff]
          %v1417 = vld [vmem:[#allocation3 + $0x18] sm:$0xff]
          %v1418 = vld [vmem:[#allocation3 + $0x20] sm:$0xff]
          %v1419 = vld [vmem:[#allocation3 + $0x28] sm:$0xff]
          %v1420 = vld [vmem:[#allocation3 + $0x30] sm:$0xff]
          %v1421 = vld [vmem:[#allocation3 + $0x38] sm:$0xff]
          %v1422 = vadd.f32 %v1406, %v1414
          %v1423 = vadd.f32 %v1407, %v1415
          %v1424 = vadd.f32 %v1408, %v1416
          %v1425 = vadd.f32 %v1409, %v1417
          %v1426 = vadd.f32 %v1410, %v1418
          %v1427 = vadd.f32 %v1411, %v1419
          %v1428 = vadd.f32 %v1412, %v1420
          %v1429 = vadd.f32 %v1413, %v1421
          %1430 = vst [vmem:[%s409] sm:$0xff] %v1422
          %1431 = vst [vmem:[%s409 + $0x8] sm:$0xff] %v1423
          %1432 = vst [vmem:[%s409 + $0x10] sm:$0xff] %v1424
          %1433 = vst [vmem:[%s409 + $0x18] sm:$0xff] %v1425
          %1434 = vst [vmem:[%s409 + $0x20] sm:$0xff] %v1426
          %1435 = vst [vmem:[%s409 + $0x28] sm:$0xff] %v1427
          %1436 = vst [vmem:[%s409 + $0x30] sm:$0xff] %v1428
          %1437 = vst [vmem:[%s409 + $0x38] sm:$0xff] %v1429
        $region76: #{tpu_custom_call.1} parent=51 // pred_fallthru
          _
        %s1438 = sand.u32 %s235, 1
        %s1439 = scalar_lea.sflag [#allocation6], %s1438
        %s1440 = sand.u32 %s235, 1
        %s1441 = smul.addr %s1440, 64
        %s1442 = scalar_lea.vmem [#allocation12], %s1441
        // Predicated region
        $region77: #{tpu_custom_call.1} parent=51 // pred_check
          %p1443 = pneg %p245
        $region78: #{tpu_custom_call.1} parent=51 // pred_check_branch
          %1445 = sbr.rel (%p1443) target = $region80
        $region79: #{tpu_custom_call.1} parent=51 // pred_region
          %s1446 = smul.u32 8, %s31
          %s1448 = ssub.s32 1024, 1024
          %1449 = vsyncadd %s1439, %s1448
          %s1450 = smul.addr %s1446, 128
          %s1451 = scalar_lea.hbm %s8, %s1450
          %s1452 = sshll.u32 %s1442, 4
          %s1453 = int_to_ptr.vmem [resolvable:$true] %s1452
          %1458 = dma.vmem_to_hbm [thread:$0]  %s1453, 1024, %s1451, %s1439, 128, 128, 8
        $region80: #{tpu_custom_call.1} parent=51 // pred_fallthru
          _
      $region52: #{tpu_custom_call.1} parent=5 // pred_fallthru
        _
      %p1459 = scmp.le.s32.totalorder 2, %s22
      // Predicated region
      $region81: #{tpu_custom_call.1} parent=5 // pred_check
        %p1460 = pneg %p1459
      $region82: #{tpu_custom_call.1} parent=5 // pred_check_branch
        %1462 = sbr.rel (%p1460) target = $region84
      $region83: #{tpu_custom_call.1} parent=5 // pred_region
        %s1463 = ssub.s32 %s22, 2
        // Predicated region
        $region85: #{tpu_custom_call.1} parent=83 // pred_check
          %p1464 = pneg %p251
        $region86: #{tpu_custom_call.1} parent=83 // pred_check_branch
          %1466 = sbr.rel (%p1464) target = $region88
        $region87: #{tpu_custom_call.1} parent=83 // pred_region
          %s1467 = sand.u32 %s236, 1
          %s1468 = scalar_lea.sflag [#allocation6], %s1467
          %s1469 = sand.u32 %s236, 1
          %s1470 = smul.addr %s1469, 64
          %s1471 = scalar_lea.vmem [#allocation12], %s1470
          %1472 = dma.done %s1468, 1024
        $region88: #{tpu_custom_call.1} parent=83 // pred_fallthru
          _
      $region84: #{tpu_custom_call.1} parent=5 // pred_fallthru
        _
    $region6: #{tpu_custom_call.1} parent=1 // loop_footer
      %s26 = sadd.s32 1, %s22
    $region7: #{tpu_custom_call.1} parent=1 // loop_footer_branch
      %21 = sbr.rel target = $region3
    $region8: #{tpu_custom_call.1} parent=1 // loop_exit
      _
    %1473 = vsyncpa [#allocation5], 1
    %s1474 = scalar_lea.sflag [#allocation5], 1
    %1475 = vsyncpa %s1474, 1
    %1476 = vsyncpa [#allocation8], 1
    %1477 = vsyncpa [#allocation11], 1
    %1478 = vsyncpa [#allocation6], 1
    %s1479 = scalar_lea.sflag [#allocation6], 1
    %1480 = vsyncpa %s1479, 1

</llo_original>
